<compile_context>
chip_gen: v5e
topology: v5e:2x2
jax: 0.10.0
libtpu: 0.0.40
codegen_flags: <defaults>
</compile_context>

<pallas_src>
import itertools
import math

import jax
import jax.numpy as jnp
from jax.experimental import pallas as pl
from jax.experimental.pallas import tpu as pltpu


def _make_flatten_kernel(feature_shape):
    """Kernel copying a (TB, *feature_shape) tile into a (TB, prod) tile,
    performing the row-major flatten entirely inside the kernel."""
    outer_dims = tuple(feature_shape[:-1])
    last = int(feature_shape[-1])

    def kernel(x_ref, o_ref):
        if not outer_dims:
            # Input is already (TB, last): plain copy.
            o_ref[...] = x_ref[...]
            return
        col = 0
        # Row-major walk over the leading feature dims; each step moves one
        # (TB, last) strip into its flattened column range.  Offsets are
        # static Python ints, so these lower to simple sliced loads/stores.
        for idx in itertools.product(*(range(int(d)) for d in outer_dims)):
            o_ref[:, pl.ds(col, last)] = x_ref[(slice(None), *idx, slice(None))]
            col += last

    return kernel


def flatten(x, *, row_block_bytes=4 * 1024 * 1024):
    """Pallas equivalent of torch Flatten.forward: x.view(N, -1)."""
    if x.ndim == 1:
        x = x[:, None]
    N = int(x.shape[0])
    feature_shape = tuple(int(d) for d in x.shape[1:])
    flat = math.prod(feature_shape)
    itemsize = jnp.dtype(x.dtype).itemsize

    # Rows per tile: keep each VMEM tile <= row_block_bytes so that the
    # double-buffered (in + out) working set fits comfortably in scoped VMEM
    # on every generation (v7x has only 64 MiB physical VMEM).
    rows_fit = max(1, row_block_bytes // max(1, flat * itemsize))
    if rows_fit >= N:
        tb = N                               # block dim == full array dim is legal
    else:
        tb = max(8, (rows_fit // 8) * 8)     # keep the sublane dim 8-aligned
    grid = (pl.cdiv(N, tb),)

    in_block = (tb,) + feature_shape
    n_feat_dims = len(feature_shape)
    kernel = _make_flatten_kernel(feature_shape)

    return pl.pallas_call(
        kernel,
        out_shape=jax.ShapeDtypeStruct((N, flat), x.dtype),
        grid_spec=pltpu.PrefetchScalarGridSpec(
            num_scalar_prefetch=0,
            grid=grid,
            in_specs=[
                pl.BlockSpec(in_block, lambda i: (i,) + (0,) * n_feat_dims),
            ],
            out_specs=pl.BlockSpec((tb, flat), lambda i: (i, 0)),
        ),
        compiler_params=pltpu.CompilerParams(
            dimension_semantics=("parallel",),   # v7x: shard batch across 2 TCs
        ),
        cost_estimate=pl.CostEstimate(
            flops=0,
            transcendentals=0,
            bytes_accessed=2 * N * flat * itemsize,
        ),
    )(x)


if __name__ == "__main__":
    key = jax.random.PRNGKey(0)
    x = jax.random.normal(key, (2, 4, 16, 16), dtype=jnp.float32)

    out = jax.block_until_ready(flatten(x))

    # Reference: same semantics as torch .view(N, -1) on contiguous input.
    ref = x.reshape(x.shape[0], -1)
    assert out.shape == ref.shape, (out.shape, ref.shape)
    assert bool(jnp.array_equal(out, ref))

    print("KERNEL_OK")
</pallas_src>

<mosaic_0001>
module attributes {stable_mosaic.version = 11 : i64} {
  func.func @kernel(%arg0: i32, %arg1: memref<2x4x16x16xf32, #tpu.memory_space<vmem>>, %arg2: memref<2x1024xf32, #tpu.memory_space<vmem>>) attributes {dimension_semantics = [#tpu.dimension_semantics<parallel>], iteration_bounds = array<i64: 1>, scalar_prefetch = 0 : i64, scratch_operands = 0 : i64, tpu.core_type = #tpu.core_type<tc>, window_params = [{transform_indices = @transform_0, window_bounds = array<i64: 2, 4, 16, 16>}, {transform_indices = @transform_1, window_bounds = array<i64: 2, 1024>}]} {
    %c0 = arith.constant 0 : index
    %c0_0 = arith.constant 0 : index
    %c0_1 = arith.constant 0 : index
    %c0_2 = arith.constant 0 : index
    %0 = vector.load %arg1[%c0, %c0_0, %c0_1, %c0_2] : memref<2x4x16x16xf32, #tpu.memory_space<vmem>>, vector<2x1x1x16xf32>
    %1 = vector.shape_cast %0 : vector<2x1x1x16xf32> to vector<2x16xf32>
    %c0_3 = arith.constant 0 : index
    %c0_4 = arith.constant 0 : index
    %2 = vector.load %arg2[%c0_3, %c0_4] : memref<2x1024xf32, #tpu.memory_space<vmem>>, vector<2x16xf32>
    tpu.vector_store %arg2[%c0_3, %c0_4], %1 {strides = array<i32>} : memref<2x1024xf32, #tpu.memory_space<vmem>>, vector<2x16xf32>,
    %c0_5 = arith.constant 0 : index
    %c0_6 = arith.constant 0 : index
    %c1 = arith.constant 1 : index
    %c0_7 = arith.constant 0 : index
    %3 = vector.load %arg1[%c0_5, %c0_6, %c1, %c0_7] : memref<2x4x16x16xf32, #tpu.memory_space<vmem>>, vector<2x1x1x16xf32>
    %4 = vector.shape_cast %3 : vector<2x1x1x16xf32> to vector<2x16xf32>
    %c0_8 = arith.constant 0 : index
    %c16 = arith.constant 16 : index
    %5 = vector.load %arg2[%c0_8, %c16] : memref<2x1024xf32, #tpu.memory_space<vmem>>, vector<2x16xf32>
    tpu.vector_store %arg2[%c0_8, %c16], %4 {strides = array<i32>} : memref<2x1024xf32, #tpu.memory_space<vmem>>, vector<2x16xf32>,
    %c0_9 = arith.constant 0 : index
    %c0_10 = arith.constant 0 : index
    %c2 = arith.constant 2 : index
    %c0_11 = arith.constant 0 : index
    %6 = vector.load %arg1[%c0_9, %c0_10, %c2, %c0_11] : memref<2x4x16x16xf32, #tpu.memory_space<vmem>>, vector<2x1x1x16xf32>
    %7 = vector.shape_cast %6 : vector<2x1x1x16xf32> to vector<2x16xf32>
    %c0_12 = arith.constant 0 : index
    %c32 = arith.constant 32 : index
    %8 = vector.load %arg2[%c0_12, %c32] : memref<2x1024xf32, #tpu.memory_space<vmem>>, vector<2x16xf32>
    tpu.vector_store %arg2[%c0_12, %c32], %7 {strides = array<i32>} : memref<2x1024xf32, #tpu.memory_space<vmem>>, vector<2x16xf32>,
    %c0_13 = arith.constant 0 : index
    %c0_14 = arith.constant 0 : index
    %c3 = arith.constant 3 : index
    %c0_15 = arith.constant 0 : index
    %9 = vector.load %arg1[%c0_13, %c0_14, %c3, %c0_15] : memref<2x4x16x16xf32, #tpu.memory_space<vmem>>, vector<2x1x1x16xf32>
    %10 = vector.shape_cast %9 : vector<2x1x1x16xf32> to vector<2x16xf32>
    %c0_16 = arith.constant 0 : index
    %c48 = arith.constant 48 : index
    %11 = vector.load %arg2[%c0_16, %c48] : memref<2x1024xf32, #tpu.memory_space<vmem>>, vector<2x16xf32>
    tpu.vector_store %arg2[%c0_16, %c48], %10 {strides = array<i32>} : memref<2x1024xf32, #tpu.memory_space<vmem>>, vector<2x16xf32>,
    %c0_17 = arith.constant 0 : index
    %c0_18 = arith.constant 0 : index
    %c4 = arith.constant 4 : index
    %c0_19 = arith.constant 0 : index
    %12 = vector.load %arg1[%c0_17, %c0_18, %c4, %c0_19] : memref<2x4x16x16xf32, #tpu.memory_space<vmem>>, vector<2x1x1x16xf32>
    %13 = vector.shape_cast %12 : vector<2x1x1x16xf32> to vector<2x16xf32>
    %c0_20 = arith.constant 0 : index
    %c64 = arith.constant 64 : index
    %14 = vector.load %arg2[%c0_20, %c64] : memref<2x1024xf32, #tpu.memory_space<vmem>>, vector<2x16xf32>
    tpu.vector_store %arg2[%c0_20, %c64], %13 {strides = array<i32>} : memref<2x1024xf32, #tpu.memory_space<vmem>>, vector<2x16xf32>,
    %c0_21 = arith.constant 0 : index
    %c0_22 = arith.constant 0 : index
    %c5 = arith.constant 5 : index
    %c0_23 = arith.constant 0 : index
    %15 = vector.load %arg1[%c0_21, %c0_22, %c5, %c0_23] : memref<2x4x16x16xf32, #tpu.memory_space<vmem>>, vector<2x1x1x16xf32>
    %16 = vector.shape_cast %15 : vector<2x1x1x16xf32> to vector<2x16xf32>
    %c0_24 = arith.constant 0 : index
    %c80 = arith.constant 80 : index
    %17 = vector.load %arg2[%c0_24, %c80] : memref<2x1024xf32, #tpu.memory_space<vmem>>, vector<2x16xf32>
    tpu.vector_store %arg2[%c0_24, %c80], %16 {strides = array<i32>} : memref<2x1024xf32, #tpu.memory_space<vmem>>, vector<2x16xf32>,
    %c0_25 = arith.constant 0 : index
    %c0_26 = arith.constant 0 : index
    %c6 = arith.constant 6 : index
    %c0_27 = arith.constant 0 : index
    %18 = vector.load %arg1[%c0_25, %c0_26, %c6, %c0_27] : memref<2x4x16x16xf32, #tpu.memory_space<vmem>>, vector<2x1x1x16xf32>
    %19 = vector.shape_cast %18 : vector<2x1x1x16xf32> to vector<2x16xf32>
    %c0_28 = arith.constant 0 : index
    %c96 = arith.constant 96 : index
    %20 = vector.load %arg2[%c0_28, %c96] : memref<2x1024xf32, #tpu.memory_space<vmem>>, vector<2x16xf32>
    tpu.vector_store %arg2[%c0_28, %c96], %19 {strides = array<i32>} : memref<2x1024xf32, #tpu.memory_space<vmem>>, vector<2x16xf32>,
    %c0_29 = arith.constant 0 : index
    %c0_30 = arith.constant 0 : index
    %c7 = arith.constant 7 : index
    %c0_31 = arith.constant 0 : index
    %21 = vector.load %arg1[%c0_29, %c0_30, %c7, %c0_31] : memref<2x4x16x16xf32, #tpu.memory_space<vmem>>, vector<2x1x1x16xf32>
    %22 = vector.shape_cast %21 : vector<2x1x1x16xf32> to vector<2x16xf32>
    %c0_32 = arith.constant 0 : index
    %c112 = arith.constant 112 : index
    %23 = vector.load %arg2[%c0_32, %c112] : memref<2x1024xf32, #tpu.memory_space<vmem>>, vector<2x16xf32>
    tpu.vector_store %arg2[%c0_32, %c112], %22 {strides = array<i32>} : memref<2x1024xf32, #tpu.memory_space<vmem>>, vector<2x16xf32>,
    %c0_33 = arith.constant 0 : index
    %c0_34 = arith.constant 0 : index
    %c8 = arith.constant 8 : index
    %c0_35 = arith.constant 0 : index
    %24 = vector.load %arg1[%c0_33, %c0_34, %c8, %c0_35] : memref<2x4x16x16xf32, #tpu.memory_space<vmem>>, vector<2x1x1x16xf32>
    %25 = vector.shape_cast %24 : vector<2x1x1x16xf32> to vector<2x16xf32>
    %c0_36 = arith.constant 0 : index
    %c128 = arith.constant 128 : index
    %26 = vector.load %arg2[%c0_36, %c128] : memref<2x1024xf32, #tpu.memory_space<vmem>>, vector<2x16xf32>
    tpu.vector_store %arg2[%c0_36, %c128], %25 {strides = array<i32>} : memref<2x1024xf32, #tpu.memory_space<vmem>>, vector<2x16xf32>,
    %c0_37 = arith.constant 0 : index
    %c0_38 = arith.constant 0 : index
    %c9 = arith.constant 9 : index
    %c0_39 = arith.constant 0 : index
    %27 = vector.load %arg1[%c0_37, %c0_38, %c9, %c0_39] : memref<2x4x16x16xf32, #tpu.memory_space<vmem>>, vector<2x1x1x16xf32>
    %28 = vector.shape_cast %27 : vector<2x1x1x16xf32> to vector<2x16xf32>
    %c0_40 = arith.constant 0 : index
    %c144 = arith.constant 144 : index
    %29 = vector.load %arg2[%c0_40, %c144] : memref<2x1024xf32, #tpu.memory_space<vmem>>, vector<2x16xf32>
    tpu.vector_store %arg2[%c0_40, %c144], %28 {strides = array<i32>} : memref<2x1024xf32, #tpu.memory_space<vmem>>, vector<2x16xf32>,
    %c0_41 = arith.constant 0 : index
    %c0_42 = arith.constant 0 : index
    %c10 = arith.constant 10 : index
    %c0_43 = arith.constant 0 : index
    %30 = vector.load %arg1[%c0_41, %c0_42, %c10, %c0_43] : memref<2x4x16x16xf32, #tpu.memory_space<vmem>>, vector<2x1x1x16xf32>
    %31 = vector.shape_cast %30 : vector<2x1x1x16xf32> to vector<2x16xf32>
    %c0_44 = arith.constant 0 : index
    %c160 = arith.constant 160 : index
    %32 = vector.load %arg2[%c0_44, %c160] : memref<2x1024xf32, #tpu.memory_space<vmem>>, vector<2x16xf32>
    tpu.vector_store %arg2[%c0_44, %c160], %31 {strides = array<i32>} : memref<2x1024xf32, #tpu.memory_space<vmem>>, vector<2x16xf32>,
    %c0_45 = arith.constant 0 : index
    %c0_46 = arith.constant 0 : index
    %c11 = arith.constant 11 : index
    %c0_47 = arith.constant 0 : index
    %33 = vector.load %arg1[%c0_45, %c0_46, %c11, %c0_47] : memref<2x4x16x16xf32, #tpu.memory_space<vmem>>, vector<2x1x1x16xf32>
    %34 = vector.shape_cast %33 : vector<2x1x1x16xf32> to vector<2x16xf32>
    %c0_48 = arith.constant 0 : index
    %c176 = arith.constant 176 : index
    %35 = vector.load %arg2[%c0_48, %c176] : memref<2x1024xf32, #tpu.memory_space<vmem>>, vector<2x16xf32>
    tpu.vector_store %arg2[%c0_48, %c176], %34 {strides = array<i32>} : memref<2x1024xf32, #tpu.memory_space<vmem>>, vector<2x16xf32>,
    %c0_49 = arith.constant 0 : index
    %c0_50 = arith.constant 0 : index
    %c12 = arith.constant 12 : index
    %c0_51 = arith.constant 0 : index
    %36 = vector.load %arg1[%c0_49, %c0_50, %c12, %c0_51] : memref<2x4x16x16xf32, #tpu.memory_space<vmem>>, vector<2x1x1x16xf32>
    %37 = vector.shape_cast %36 : vector<2x1x1x16xf32> to vector<2x16xf32>
    %c0_52 = arith.constant 0 : index
    %c192 = arith.constant 192 : index
    %38 = vector.load %arg2[%c0_52, %c192] : memref<2x1024xf32, #tpu.memory_space<vmem>>, vector<2x16xf32>
    tpu.vector_store %arg2[%c0_52, %c192], %37 {strides = array<i32>} : memref<2x1024xf32, #tpu.memory_space<vmem>>, vector<2x16xf32>,
    %c0_53 = arith.constant 0 : index
    %c0_54 = arith.constant 0 : index
    %c13 = arith.constant 13 : index
    %c0_55 = arith.constant 0 : index
    %39 = vector.load %arg1[%c0_53, %c0_54, %c13, %c0_55] : memref<2x4x16x16xf32, #tpu.memory_space<vmem>>, vector<2x1x1x16xf32>
    %40 = vector.shape_cast %39 : vector<2x1x1x16xf32> to vector<2x16xf32>
    %c0_56 = arith.constant 0 : index
    %c208 = arith.constant 208 : index
    %41 = vector.load %arg2[%c0_56, %c208] : memref<2x1024xf32, #tpu.memory_space<vmem>>, vector<2x16xf32>
    tpu.vector_store %arg2[%c0_56, %c208], %40 {strides = array<i32>} : memref<2x1024xf32, #tpu.memory_space<vmem>>, vector<2x16xf32>,
    %c0_57 = arith.constant 0 : index
    %c0_58 = arith.constant 0 : index
    %c14 = arith.constant 14 : index
    %c0_59 = arith.constant 0 : index
    %42 = vector.load %arg1[%c0_57, %c0_58, %c14, %c0_59] : memref<2x4x16x16xf32, #tpu.memory_space<vmem>>, vector<2x1x1x16xf32>
    %43 = vector.shape_cast %42 : vector<2x1x1x16xf32> to vector<2x16xf32>
    %c0_60 = arith.constant 0 : index
    %c224 = arith.constant 224 : index
    %44 = vector.load %arg2[%c0_60, %c224] : memref<2x1024xf32, #tpu.memory_space<vmem>>, vector<2x16xf32>
    tpu.vector_store %arg2[%c0_60, %c224], %43 {strides = array<i32>} : memref<2x1024xf32, #tpu.memory_space<vmem>>, vector<2x16xf32>,
    %c0_61 = arith.constant 0 : index
    %c0_62 = arith.constant 0 : index
    %c15 = arith.constant 15 : index
    %c0_63 = arith.constant 0 : index
    %45 = vector.load %arg1[%c0_61, %c0_62, %c15, %c0_63] : memref<2x4x16x16xf32, #tpu.memory_space<vmem>>, vector<2x1x1x16xf32>
    %46 = vector.shape_cast %45 : vector<2x1x1x16xf32> to vector<2x16xf32>
    %c0_64 = arith.constant 0 : index
    %c240 = arith.constant 240 : index
    %47 = vector.load %arg2[%c0_64, %c240] : memref<2x1024xf32, #tpu.memory_space<vmem>>, vector<2x16xf32>
    tpu.vector_store %arg2[%c0_64, %c240], %46 {strides = array<i32>} : memref<2x1024xf32, #tpu.memory_space<vmem>>, vector<2x16xf32>,
    %c0_65 = arith.constant 0 : index
    %c1_66 = arith.constant 1 : index
    %c0_67 = arith.constant 0 : index
    %c0_68 = arith.constant 0 : index
    %48 = vector.load %arg1[%c0_65, %c1_66, %c0_67, %c0_68] : memref<2x4x16x16xf32, #tpu.memory_space<vmem>>, vector<2x1x1x16xf32>
    %49 = vector.shape_cast %48 : vector<2x1x1x16xf32> to vector<2x16xf32>
    %c0_69 = arith.constant 0 : index
    %c256 = arith.constant 256 : index
    %50 = vector.load %arg2[%c0_69, %c256] : memref<2x1024xf32, #tpu.memory_space<vmem>>, vector<2x16xf32>
    tpu.vector_store %arg2[%c0_69, %c256], %49 {strides = array<i32>} : memref<2x1024xf32, #tpu.memory_space<vmem>>, vector<2x16xf32>,
    %c0_70 = arith.constant 0 : index
    %c1_71 = arith.constant 1 : index
    %c1_72 = arith.constant 1 : index
    %c0_73 = arith.constant 0 : index
    %51 = vector.load %arg1[%c0_70, %c1_71, %c1_72, %c0_73] : memref<2x4x16x16xf32, #tpu.memory_space<vmem>>, vector<2x1x1x16xf32>
    %52 = vector.shape_cast %51 : vector<2x1x1x16xf32> to vector<2x16xf32>
    %c0_74 = arith.constant 0 : index
    %c272 = arith.constant 272 : index
    %53 = vector.load %arg2[%c0_74, %c272] : memref<2x1024xf32, #tpu.memory_space<vmem>>, vector<2x16xf32>
    tpu.vector_store %arg2[%c0_74, %c272], %52 {strides = array<i32>} : memref<2x1024xf32, #tpu.memory_space<vmem>>, vector<2x16xf32>,
    %c0_75 = arith.constant 0 : index
    %c1_76 = arith.constant 1 : index
    %c2_77 = arith.constant 2 : index
    %c0_78 = arith.constant 0 : index
    %54 = vector.load %arg1[%c0_75, %c1_76, %c2_77, %c0_78] : memref<2x4x16x16xf32, #tpu.memory_space<vmem>>, vector<2x1x1x16xf32>
    %55 = vector.shape_cast %54 : vector<2x1x1x16xf32> to vector<2x16xf32>
    %c0_79 = arith.constant 0 : index
    %c288 = arith.constant 288 : index
    %56 = vector.load %arg2[%c0_79, %c288] : memref<2x1024xf32, #tpu.memory_space<vmem>>, vector<2x16xf32>
    tpu.vector_store %arg2[%c0_79, %c288], %55 {strides = array<i32>} : memref<2x1024xf32, #tpu.memory_space<vmem>>, vector<2x16xf32>,
    %c0_80 = arith.constant 0 : index
    %c1_81 = arith.constant 1 : index
    %c3_82 = arith.constant 3 : index
    %c0_83 = arith.constant 0 : index
    %57 = vector.load %arg1[%c0_80, %c1_81, %c3_82, %c0_83] : memref<2x4x16x16xf32, #tpu.memory_space<vmem>>, vector<2x1x1x16xf32>
    %58 = vector.shape_cast %57 : vector<2x1x1x16xf32> to vector<2x16xf32>
    %c0_84 = arith.constant 0 : index
    %c304 = arith.constant 304 : index
    %59 = vector.load %arg2[%c0_84, %c304] : memref<2x1024xf32, #tpu.memory_space<vmem>>, vector<2x16xf32>
    tpu.vector_store %arg2[%c0_84, %c304], %58 {strides = array<i32>} : memref<2x1024xf32, #tpu.memory_space<vmem>>, vector<2x16xf32>,
    %c0_85 = arith.constant 0 : index
    %c1_86 = arith.constant 1 : index
    %c4_87 = arith.constant 4 : index
    %c0_88 = arith.constant 0 : index
    %60 = vector.load %arg1[%c0_85, %c1_86, %c4_87, %c0_88] : memref<2x4x16x16xf32, #tpu.memory_space<vmem>>, vector<2x1x1x16xf32>
    %61 = vector.shape_cast %60 : vector<2x1x1x16xf32> to vector<2x16xf32>
    %c0_89 = arith.constant 0 : index
    %c320 = arith.constant 320 : index
    %62 = vector.load %arg2[%c0_89, %c320] : memref<2x1024xf32, #tpu.memory_space<vmem>>, vector<2x16xf32>
    tpu.vector_store %arg2[%c0_89, %c320], %61 {strides = array<i32>} : memref<2x1024xf32, #tpu.memory_space<vmem>>, vector<2x16xf32>,
    %c0_90 = arith.constant 0 : index
    %c1_91 = arith.constant 1 : index
    %c5_92 = arith.constant 5 : index
    %c0_93 = arith.constant 0 : index
    %63 = vector.load %arg1[%c0_90, %c1_91, %c5_92, %c0_93] : memref<2x4x16x16xf32, #tpu.memory_space<vmem>>, vector<2x1x1x16xf32>
    %64 = vector.shape_cast %63 : vector<2x1x1x16xf32> to vector<2x16xf32>
    %c0_94 = arith.constant 0 : index
    %c336 = arith.constant 336 : index
    %65 = vector.load %arg2[%c0_94, %c336] : memref<2x1024xf32, #tpu.memory_space<vmem>>, vector<2x16xf32>
    tpu.vector_store %arg2[%c0_94, %c336], %64 {strides = array<i32>} : memref<2x1024xf32, #tpu.memory_space<vmem>>, vector<2x16xf32>,
    %c0_95 = arith.constant 0 : index
    %c1_96 = arith.constant 1 : index
    %c6_97 = arith.constant 6 : index
    %c0_98 = arith.constant 0 : index
    %66 = vector.load %arg1[%c0_95, %c1_96, %c6_97, %c0_98] : memref<2x4x16x16xf32, #tpu.memory_space<vmem>>, vector<2x1x1x16xf32>
    %67 = vector.shape_cast %66 : vector<2x1x1x16xf32> to vector<2x16xf32>
    %c0_99 = arith.constant 0 : index
    %c352 = arith.constant 352 : index
    %68 = vector.load %arg2[%c0_99, %c352] : memref<2x1024xf32, #tpu.memory_space<vmem>>, vector<2x16xf32>
    tpu.vector_store %arg2[%c0_99, %c352], %67 {strides = array<i32>} : memref<2x1024xf32, #tpu.memory_space<vmem>>, vector<2x16xf32>,
    %c0_100 = arith.constant 0 : index
    %c1_101 = arith.constant 1 : index
    %c7_102 = arith.constant 7 : index
    %c0_103 = arith.constant 0 : index
    %69 = vector.load %arg1[%c0_100, %c1_101, %c7_102, %c0_103] : memref<2x4x16x16xf32, #tpu.memory_space<vmem>>, vector<2x1x1x16xf32>
    %70 = vector.shape_cast %69 : vector<2x1x1x16xf32> to vector<2x16xf32>
    %c0_104 = arith.constant 0 : index
    %c368 = arith.constant 368 : index
    %71 = vector.load %arg2[%c0_104, %c368] : memref<2x1024xf32, #tpu.memory_space<vmem>>, vector<2x16xf32>
    tpu.vector_store %arg2[%c0_104, %c368], %70 {strides = array<i32>} : memref<2x1024xf32, #tpu.memory_space<vmem>>, vector<2x16xf32>,
    %c0_105 = arith.constant 0 : index
    %c1_106 = arith.constant 1 : index
    %c8_107 = arith.constant 8 : index
    %c0_108 = arith.constant 0 : index
    %72 = vector.load %arg1[%c0_105, %c1_106, %c8_107, %c0_108] : memref<2x4x16x16xf32, #tpu.memory_space<vmem>>, vector<2x1x1x16xf32>
    %73 = vector.shape_cast %72 : vector<2x1x1x16xf32> to vector<2x16xf32>
    %c0_109 = arith.constant 0 : index
    %c384 = arith.constant 384 : index
    %74 = vector.load %arg2[%c0_109, %c384] : memref<2x1024xf32, #tpu.memory_space<vmem>>, vector<2x16xf32>
    tpu.vector_store %arg2[%c0_109, %c384], %73 {strides = array<i32>} : memref<2x1024xf32, #tpu.memory_space<vmem>>, vector<2x16xf32>,
    %c0_110 = arith.constant 0 : index
    %c1_111 = arith.constant 1 : index
    %c9_112 = arith.constant 9 : index
    %c0_113 = arith.constant 0 : index
    %75 = vector.load %arg1[%c0_110, %c1_111, %c9_112, %c0_113] : memref<2x4x16x16xf32, #tpu.memory_space<vmem>>, vector<2x1x1x16xf32>
    %76 = vector.shape_cast %75 : vector<2x1x1x16xf32> to vector<2x16xf32>
    %c0_114 = arith.constant 0 : index
    %c400 = arith.constant 400 : index
    %77 = vector.load %arg2[%c0_114, %c400] : memref<2x1024xf32, #tpu.memory_space<vmem>>, vector<2x16xf32>
    tpu.vector_store %arg2[%c0_114, %c400], %76 {strides = array<i32>} : memref<2x1024xf32, #tpu.memory_space<vmem>>, vector<2x16xf32>,
    %c0_115 = arith.constant 0 : index
    %c1_116 = arith.constant 1 : index
    %c10_117 = arith.constant 10 : index
    %c0_118 = arith.constant 0 : index
    %78 = vector.load %arg1[%c0_115, %c1_116, %c10_117, %c0_118] : memref<2x4x16x16xf32, #tpu.memory_space<vmem>>, vector<2x1x1x16xf32>
    %79 = vector.shape_cast %78 : vector<2x1x1x16xf32> to vector<2x16xf32>
    %c0_119 = arith.constant 0 : index
    %c416 = arith.constant 416 : index
    %80 = vector.load %arg2[%c0_119, %c416] : memref<2x1024xf32, #tpu.memory_space<vmem>>, vector<2x16xf32>
    tpu.vector_store %arg2[%c0_119, %c416], %79 {strides = array<i32>} : memref<2x1024xf32, #tpu.memory_space<vmem>>, vector<2x16xf32>,
    %c0_120 = arith.constant 0 : index
    %c1_121 = arith.constant 1 : index
    %c11_122 = arith.constant 11 : index
    %c0_123 = arith.constant 0 : index
    %81 = vector.load %arg1[%c0_120, %c1_121, %c11_122, %c0_123] : memref<2x4x16x16xf32, #tpu.memory_space<vmem>>, vector<2x1x1x16xf32>
    %82 = vector.shape_cast %81 : vector<2x1x1x16xf32> to vector<2x16xf32>
    %c0_124 = arith.constant 0 : index
    %c432 = arith.constant 432 : index
    %83 = vector.load %arg2[%c0_124, %c432] : memref<2x1024xf32, #tpu.memory_space<vmem>>, vector<2x16xf32>
    tpu.vector_store %arg2[%c0_124, %c432], %82 {strides = array<i32>} : memref<2x1024xf32, #tpu.memory_space<vmem>>, vector<2x16xf32>,
    %c0_125 = arith.constant 0 : index
    %c1_126 = arith.constant 1 : index
    %c12_127 = arith.constant 12 : index
    %c0_128 = arith.constant 0 : index
    %84 = vector.load %arg1[%c0_125, %c1_126, %c12_127, %c0_128] : memref<2x4x16x16xf32, #tpu.memory_space<vmem>>, vector<2x1x1x16xf32>
    %85 = vector.shape_cast %84 : vector<2x1x1x16xf32> to vector<2x16xf32>
    %c0_129 = arith.constant 0 : index
    %c448 = arith.constant 448 : index
    %86 = vector.load %arg2[%c0_129, %c448] : memref<2x1024xf32, #tpu.memory_space<vmem>>, vector<2x16xf32>
    tpu.vector_store %arg2[%c0_129, %c448], %85 {strides = array<i32>} : memref<2x1024xf32, #tpu.memory_space<vmem>>, vector<2x16xf32>,
    %c0_130 = arith.constant 0 : index
    %c1_131 = arith.constant 1 : index
    %c13_132 = arith.constant 13 : index
    %c0_133 = arith.constant 0 : index
    %87 = vector.load %arg1[%c0_130, %c1_131, %c13_132, %c0_133] : memref<2x4x16x16xf32, #tpu.memory_space<vmem>>, vector<2x1x1x16xf32>
    %88 = vector.shape_cast %87 : vector<2x1x1x16xf32> to vector<2x16xf32>
    %c0_134 = arith.constant 0 : index
    %c464 = arith.constant 464 : index
    %89 = vector.load %arg2[%c0_134, %c464] : memref<2x1024xf32, #tpu.memory_space<vmem>>, vector<2x16xf32>
    tpu.vector_store %arg2[%c0_134, %c464], %88 {strides = array<i32>} : memref<2x1024xf32, #tpu.memory_space<vmem>>, vector<2x16xf32>,
    %c0_135 = arith.constant 0 : index
    %c1_136 = arith.constant 1 : index
    %c14_137 = arith.constant 14 : index
    %c0_138 = arith.constant 0 : index
    %90 = vector.load %arg1[%c0_135, %c1_136, %c14_137, %c0_138] : memref<2x4x16x16xf32, #tpu.memory_space<vmem>>, vector<2x1x1x16xf32>
    %91 = vector.shape_cast %90 : vector<2x1x1x16xf32> to vector<2x16xf32>
    %c0_139 = arith.constant 0 : index
    %c480 = arith.constant 480 : index
    %92 = vector.load %arg2[%c0_139, %c480] : memref<2x1024xf32, #tpu.memory_space<vmem>>, vector<2x16xf32>
    tpu.vector_store %arg2[%c0_139, %c480], %91 {strides = array<i32>} : memref<2x1024xf32, #tpu.memory_space<vmem>>, vector<2x16xf32>,
    %c0_140 = arith.constant 0 : index
    %c1_141 = arith.constant 1 : index
    %c15_142 = arith.constant 15 : index
    %c0_143 = arith.constant 0 : index
    %93 = vector.load %arg1[%c0_140, %c1_141, %c15_142, %c0_143] : memref<2x4x16x16xf32, #tpu.memory_space<vmem>>, vector<2x1x1x16xf32>
    %94 = vector.shape_cast %93 : vector<2x1x1x16xf32> to vector<2x16xf32>
    %c0_144 = arith.constant 0 : index
    %c496 = arith.constant 496 : index
    %95 = vector.load %arg2[%c0_144, %c496] : memref<2x1024xf32, #tpu.memory_space<vmem>>, vector<2x16xf32>
    tpu.vector_store %arg2[%c0_144, %c496], %94 {strides = array<i32>} : memref<2x1024xf32, #tpu.memory_space<vmem>>, vector<2x16xf32>,
    %c0_145 = arith.constant 0 : index
    %c2_146 = arith.constant 2 : index
    %c0_147 = arith.constant 0 : index
    %c0_148 = arith.constant 0 : index
    %96 = vector.load %arg1[%c0_145, %c2_146, %c0_147, %c0_148] : memref<2x4x16x16xf32, #tpu.memory_space<vmem>>, vector<2x1x1x16xf32>
    %97 = vector.shape_cast %96 : vector<2x1x1x16xf32> to vector<2x16xf32>
    %c0_149 = arith.constant 0 : index
    %c512 = arith.constant 512 : index
    %98 = vector.load %arg2[%c0_149, %c512] : memref<2x1024xf32, #tpu.memory_space<vmem>>, vector<2x16xf32>
    tpu.vector_store %arg2[%c0_149, %c512], %97 {strides = array<i32>} : memref<2x1024xf32, #tpu.memory_space<vmem>>, vector<2x16xf32>,
    %c0_150 = arith.constant 0 : index
    %c2_151 = arith.constant 2 : index
    %c1_152 = arith.constant 1 : index
    %c0_153 = arith.constant 0 : index
    %99 = vector.load %arg1[%c0_150, %c2_151, %c1_152, %c0_153] : memref<2x4x16x16xf32, #tpu.memory_space<vmem>>, vector<2x1x1x16xf32>
    %100 = vector.shape_cast %99 : vector<2x1x1x16xf32> to vector<2x16xf32>
    %c0_154 = arith.constant 0 : index
    %c528 = arith.constant 528 : index
    %101 = vector.load %arg2[%c0_154, %c528] : memref<2x1024xf32, #tpu.memory_space<vmem>>, vector<2x16xf32>
    tpu.vector_store %arg2[%c0_154, %c528], %100 {strides = array<i32>} : memref<2x1024xf32, #tpu.memory_space<vmem>>, vector<2x16xf32>,
    %c0_155 = arith.constant 0 : index
    %c2_156 = arith.constant 2 : index
    %c2_157 = arith.constant 2 : index
    %c0_158 = arith.constant 0 : index
    %102 = vector.load %arg1[%c0_155, %c2_156, %c2_157, %c0_158] : memref<2x4x16x16xf32, #tpu.memory_space<vmem>>, vector<2x1x1x16xf32>
    %103 = vector.shape_cast %102 : vector<2x1x1x16xf32> to vector<2x16xf32>
    %c0_159 = arith.constant 0 : index
    %c544 = arith.constant 544 : index
    %104 = vector.load %arg2[%c0_159, %c544] : memref<2x1024xf32, #tpu.memory_space<vmem>>, vector<2x16xf32>
    tpu.vector_store %arg2[%c0_159, %c544], %103 {strides = array<i32>} : memref<2x1024xf32, #tpu.memory_space<vmem>>, vector<2x16xf32>,
    %c0_160 = arith.constant 0 : index
    %c2_161 = arith.constant 2 : index
    %c3_162 = arith.constant 3 : index
    %c0_163 = arith.constant 0 : index
    %105 = vector.load %arg1[%c0_160, %c2_161, %c3_162, %c0_163] : memref<2x4x16x16xf32, #tpu.memory_space<vmem>>, vector<2x1x1x16xf32>
    %106 = vector.shape_cast %105 : vector<2x1x1x16xf32> to vector<2x16xf32>
    %c0_164 = arith.constant 0 : index
    %c560 = arith.constant 560 : index
    %107 = vector.load %arg2[%c0_164, %c560] : memref<2x1024xf32, #tpu.memory_space<vmem>>, vector<2x16xf32>
    tpu.vector_store %arg2[%c0_164, %c560], %106 {strides = array<i32>} : memref<2x1024xf32, #tpu.memory_space<vmem>>, vector<2x16xf32>,
    %c0_165 = arith.constant 0 : index
    %c2_166 = arith.constant 2 : index
    %c4_167 = arith.constant 4 : index
    %c0_168 = arith.constant 0 : index
    %108 = vector.load %arg1[%c0_165, %c2_166, %c4_167, %c0_168] : memref<2x4x16x16xf32, #tpu.memory_space<vmem>>, vector<2x1x1x16xf32>
    %109 = vector.shape_cast %108 : vector<2x1x1x16xf32> to vector<2x16xf32>
    %c0_169 = arith.constant 0 : index
    %c576 = arith.constant 576 : index
    %110 = vector.load %arg2[%c0_169, %c576] : memref<2x1024xf32, #tpu.memory_space<vmem>>, vector<2x16xf32>
    tpu.vector_store %arg2[%c0_169, %c576], %109 {strides = array<i32>} : memref<2x1024xf32, #tpu.memory_space<vmem>>, vector<2x16xf32>,
    %c0_170 = arith.constant 0 : index
    %c2_171 = arith.constant 2 : index
    %c5_172 = arith.constant 5 : index
    %c0_173 = arith.constant 0 : index
    %111 = vector.load %arg1[%c0_170, %c2_171, %c5_172, %c0_173] : memref<2x4x16x16xf32, #tpu.memory_space<vmem>>, vector<2x1x1x16xf32>
    %112 = vector.shape_cast %111 : vector<2x1x1x16xf32> to vector<2x16xf32>
    %c0_174 = arith.constant 0 : index
    %c592 = arith.constant 592 : index
    %113 = vector.load %arg2[%c0_174, %c592] : memref<2x1024xf32, #tpu.memory_space<vmem>>, vector<2x16xf32>
    tpu.vector_store %arg2[%c0_174, %c592], %112 {strides = array<i32>} : memref<2x1024xf32, #tpu.memory_space<vmem>>, vector<2x16xf32>,
    %c0_175 = arith.constant 0 : index
    %c2_176 = arith.constant 2 : index
    %c6_177 = arith.constant 6 : index
    %c0_178 = arith.constant 0 : index
    %114 = vector.load %arg1[%c0_175, %c2_176, %c6_177, %c0_178] : memref<2x4x16x16xf32, #tpu.memory_space<vmem>>, vector<2x1x1x16xf32>
    %115 = vector.shape_cast %114 : vector<2x1x1x16xf32> to vector<2x16xf32>
    %c0_179 = arith.constant 0 : index
    %c608 = arith.constant 608 : index
    %116 = vector.load %arg2[%c0_179, %c608] : memref<2x1024xf32, #tpu.memory_space<vmem>>, vector<2x16xf32>
    tpu.vector_store %arg2[%c0_179, %c608], %115 {strides = array<i32>} : memref<2x1024xf32, #tpu.memory_space<vmem>>, vector<2x16xf32>,
    %c0_180 = arith.constant 0 : index
    %c2_181 = arith.constant 2 : index
    %c7_182 = arith.constant 7 : index
    %c0_183 = arith.constant 0 : index
    %117 = vector.load %arg1[%c0_180, %c2_181, %c7_182, %c0_183] : memref<2x4x16x16xf32, #tpu.memory_space<vmem>>, vector<2x1x1x16xf32>
    %118 = vector.shape_cast %117 : vector<2x1x1x16xf32> to vector<2x16xf32>
    %c0_184 = arith.constant 0 : index
    %c624 = arith.constant 624 : index
    %119 = vector.load %arg2[%c0_184, %c624] : memref<2x1024xf32, #tpu.memory_space<vmem>>, vector<2x16xf32>
    tpu.vector_store %arg2[%c0_184, %c624], %118 {strides = array<i32>} : memref<2x1024xf32, #tpu.memory_space<vmem>>, vector<2x16xf32>,
    %c0_185 = arith.constant 0 : index
    %c2_186 = arith.constant 2 : index
    %c8_187 = arith.constant 8 : index
    %c0_188 = arith.constant 0 : index
    %120 = vector.load %arg1[%c0_185, %c2_186, %c8_187, %c0_188] : memref<2x4x16x16xf32, #tpu.memory_space<vmem>>, vector<2x1x1x16xf32>
    %121 = vector.shape_cast %120 : vector<2x1x1x16xf32> to vector<2x16xf32>
    %c0_189 = arith.constant 0 : index
    %c640 = arith.constant 640 : index
    %122 = vector.load %arg2[%c0_189, %c640] : memref<2x1024xf32, #tpu.memory_space<vmem>>, vector<2x16xf32>
    tpu.vector_store %arg2[%c0_189, %c640], %121 {strides = array<i32>} : memref<2x1024xf32, #tpu.memory_space<vmem>>, vector<2x16xf32>,
    %c0_190 = arith.constant 0 : index
    %c2_191 = arith.constant 2 : index
    %c9_192 = arith.constant 9 : index
    %c0_193 = arith.constant 0 : index
    %123 = vector.load %arg1[%c0_190, %c2_191, %c9_192, %c0_193] : memref<2x4x16x16xf32, #tpu.memory_space<vmem>>, vector<2x1x1x16xf32>
    %124 = vector.shape_cast %123 : vector<2x1x1x16xf32> to vector<2x16xf32>
    %c0_194 = arith.constant 0 : index
    %c656 = arith.constant 656 : index
    %125 = vector.load %arg2[%c0_194, %c656] : memref<2x1024xf32, #tpu.memory_space<vmem>>, vector<2x16xf32>
    tpu.vector_store %arg2[%c0_194, %c656], %124 {strides = array<i32>} : memref<2x1024xf32, #tpu.memory_space<vmem>>, vector<2x16xf32>,
    %c0_195 = arith.constant 0 : index
    %c2_196 = arith.constant 2 : index
    %c10_197 = arith.constant 10 : index
    %c0_198 = arith.constant 0 : index
    %126 = vector.load %arg1[%c0_195, %c2_196, %c10_197, %c0_198] : memref<2x4x16x16xf32, #tpu.memory_space<vmem>>, vector<2x1x1x16xf32>
    %127 = vector.shape_cast %126 : vector<2x1x1x16xf32> to vector<2x16xf32>
    %c0_199 = arith.constant 0 : index
    %c672 = arith.constant 672 : index
    %128 = vector.load %arg2[%c0_199, %c672] : memref<2x1024xf32, #tpu.memory_space<vmem>>, vector<2x16xf32>
    tpu.vector_store %arg2[%c0_199, %c672], %127 {strides = array<i32>} : memref<2x1024xf32, #tpu.memory_space<vmem>>, vector<2x16xf32>,
    %c0_200 = arith.constant 0 : index
    %c2_201 = arith.constant 2 : index
    %c11_202 = arith.constant 11 : index
    %c0_203 = arith.constant 0 : index
    %129 = vector.load %arg1[%c0_200, %c2_201, %c11_202, %c0_203] : memref<2x4x16x16xf32, #tpu.memory_space<vmem>>, vector<2x1x1x16xf32>
    %130 = vector.shape_cast %129 : vector<2x1x1x16xf32> to vector<2x16xf32>
    %c0_204 = arith.constant 0 : index
    %c688 = arith.constant 688 : index
    %131 = vector.load %arg2[%c0_204, %c688] : memref<2x1024xf32, #tpu.memory_space<vmem>>, vector<2x16xf32>
    tpu.vector_store %arg2[%c0_204, %c688], %130 {strides = array<i32>} : memref<2x1024xf32, #tpu.memory_space<vmem>>, vector<2x16xf32>,
    %c0_205 = arith.constant 0 : index
    %c2_206 = arith.constant 2 : index
    %c12_207 = arith.constant 12 : index
    %c0_208 = arith.constant 0 : index
    %132 = vector.load %arg1[%c0_205, %c2_206, %c12_207, %c0_208] : memref<2x4x16x16xf32, #tpu.memory_space<vmem>>, vector<2x1x1x16xf32>
    %133 = vector.shape_cast %132 : vector<2x1x1x16xf32> to vector<2x16xf32>
    %c0_209 = arith.constant 0 : index
    %c704 = arith.constant 704 : index
    %134 = vector.load %arg2[%c0_209, %c704] : memref<2x1024xf32, #tpu.memory_space<vmem>>, vector<2x16xf32>
    tpu.vector_store %arg2[%c0_209, %c704], %133 {strides = array<i32>} : memref<2x1024xf32, #tpu.memory_space<vmem>>, vector<2x16xf32>,
    %c0_210 = arith.constant 0 : index
    %c2_211 = arith.constant 2 : index
    %c13_212 = arith.constant 13 : index
    %c0_213 = arith.constant 0 : index
    %135 = vector.load %arg1[%c0_210, %c2_211, %c13_212, %c0_213] : memref<2x4x16x16xf32, #tpu.memory_space<vmem>>, vector<2x1x1x16xf32>
    %136 = vector.shape_cast %135 : vector<2x1x1x16xf32> to vector<2x16xf32>
    %c0_214 = arith.constant 0 : index
    %c720 = arith.constant 720 : index
    %137 = vector.load %arg2[%c0_214, %c720] : memref<2x1024xf32, #tpu.memory_space<vmem>>, vector<2x16xf32>
    tpu.vector_store %arg2[%c0_214, %c720], %136 {strides = array<i32>} : memref<2x1024xf32, #tpu.memory_space<vmem>>, vector<2x16xf32>,
    %c0_215 = arith.constant 0 : index
    %c2_216 = arith.constant 2 : index
    %c14_217 = arith.constant 14 : index
    %c0_218 = arith.constant 0 : index
    %138 = vector.load %arg1[%c0_215, %c2_216, %c14_217, %c0_218] : memref<2x4x16x16xf32, #tpu.memory_space<vmem>>, vector<2x1x1x16xf32>
    %139 = vector.shape_cast %138 : vector<2x1x1x16xf32> to vector<2x16xf32>
    %c0_219 = arith.constant 0 : index
    %c736 = arith.constant 736 : index
    %140 = vector.load %arg2[%c0_219, %c736] : memref<2x1024xf32, #tpu.memory_space<vmem>>, vector<2x16xf32>
    tpu.vector_store %arg2[%c0_219, %c736], %139 {strides = array<i32>} : memref<2x1024xf32, #tpu.memory_space<vmem>>, vector<2x16xf32>,
    %c0_220 = arith.constant 0 : index
    %c2_221 = arith.constant 2 : index
    %c15_222 = arith.constant 15 : index
    %c0_223 = arith.constant 0 : index
    %141 = vector.load %arg1[%c0_220, %c2_221, %c15_222, %c0_223] : memref<2x4x16x16xf32, #tpu.memory_space<vmem>>, vector<2x1x1x16xf32>
    %142 = vector.shape_cast %141 : vector<2x1x1x16xf32> to vector<2x16xf32>
    %c0_224 = arith.constant 0 : index
    %c752 = arith.constant 752 : index
    %143 = vector.load %arg2[%c0_224, %c752] : memref<2x1024xf32, #tpu.memory_space<vmem>>, vector<2x16xf32>
    tpu.vector_store %arg2[%c0_224, %c752], %142 {strides = array<i32>} : memref<2x1024xf32, #tpu.memory_space<vmem>>, vector<2x16xf32>,
    %c0_225 = arith.constant 0 : index
    %c3_226 = arith.constant 3 : index
    %c0_227 = arith.constant 0 : index
    %c0_228 = arith.constant 0 : index
    %144 = vector.load %arg1[%c0_225, %c3_226, %c0_227, %c0_228] : memref<2x4x16x16xf32, #tpu.memory_space<vmem>>, vector<2x1x1x16xf32>
    %145 = vector.shape_cast %144 : vector<2x1x1x16xf32> to vector<2x16xf32>
    %c0_229 = arith.constant 0 : index
    %c768 = arith.constant 768 : index
    %146 = vector.load %arg2[%c0_229, %c768] : memref<2x1024xf32, #tpu.memory_space<vmem>>, vector<2x16xf32>
    tpu.vector_store %arg2[%c0_229, %c768], %145 {strides = array<i32>} : memref<2x1024xf32, #tpu.memory_space<vmem>>, vector<2x16xf32>,
    %c0_230 = arith.constant 0 : index
    %c3_231 = arith.constant 3 : index
    %c1_232 = arith.constant 1 : index
    %c0_233 = arith.constant 0 : index
    %147 = vector.load %arg1[%c0_230, %c3_231, %c1_232, %c0_233] : memref<2x4x16x16xf32, #tpu.memory_space<vmem>>, vector<2x1x1x16xf32>
    %148 = vector.shape_cast %147 : vector<2x1x1x16xf32> to vector<2x16xf32>
    %c0_234 = arith.constant 0 : index
    %c784 = arith.constant 784 : index
    %149 = vector.load %arg2[%c0_234, %c784] : memref<2x1024xf32, #tpu.memory_space<vmem>>, vector<2x16xf32>
    tpu.vector_store %arg2[%c0_234, %c784], %148 {strides = array<i32>} : memref<2x1024xf32, #tpu.memory_space<vmem>>, vector<2x16xf32>,
    %c0_235 = arith.constant 0 : index
    %c3_236 = arith.constant 3 : index
    %c2_237 = arith.constant 2 : index
    %c0_238 = arith.constant 0 : index
    %150 = vector.load %arg1[%c0_235, %c3_236, %c2_237, %c0_238] : memref<2x4x16x16xf32, #tpu.memory_space<vmem>>, vector<2x1x1x16xf32>
    %151 = vector.shape_cast %150 : vector<2x1x1x16xf32> to vector<2x16xf32>
    %c0_239 = arith.constant 0 : index
    %c800 = arith.constant 800 : index
    %152 = vector.load %arg2[%c0_239, %c800] : memref<2x1024xf32, #tpu.memory_space<vmem>>, vector<2x16xf32>
    tpu.vector_store %arg2[%c0_239, %c800], %151 {strides = array<i32>} : memref<2x1024xf32, #tpu.memory_space<vmem>>, vector<2x16xf32>,
    %c0_240 = arith.constant 0 : index
    %c3_241 = arith.constant 3 : index
    %c3_242 = arith.constant 3 : index
    %c0_243 = arith.constant 0 : index
    %153 = vector.load %arg1[%c0_240, %c3_241, %c3_242, %c0_243] : memref<2x4x16x16xf32, #tpu.memory_space<vmem>>, vector<2x1x1x16xf32>
    %154 = vector.shape_cast %153 : vector<2x1x1x16xf32> to vector<2x16xf32>
    %c0_244 = arith.constant 0 : index
    %c816 = arith.constant 816 : index
    %155 = vector.load %arg2[%c0_244, %c816] : memref<2x1024xf32, #tpu.memory_space<vmem>>, vector<2x16xf32>
    tpu.vector_store %arg2[%c0_244, %c816], %154 {strides = array<i32>} : memref<2x1024xf32, #tpu.memory_space<vmem>>, vector<2x16xf32>,
    %c0_245 = arith.constant 0 : index
    %c3_246 = arith.constant 3 : index
    %c4_247 = arith.constant 4 : index
    %c0_248 = arith.constant 0 : index
    %156 = vector.load %arg1[%c0_245, %c3_246, %c4_247, %c0_248] : memref<2x4x16x16xf32, #tpu.memory_space<vmem>>, vector<2x1x1x16xf32>
    %157 = vector.shape_cast %156 : vector<2x1x1x16xf32> to vector<2x16xf32>
    %c0_249 = arith.constant 0 : index
    %c832 = arith.constant 832 : index
    %158 = vector.load %arg2[%c0_249, %c832] : memref<2x1024xf32, #tpu.memory_space<vmem>>, vector<2x16xf32>
    tpu.vector_store %arg2[%c0_249, %c832], %157 {strides = array<i32>} : memref<2x1024xf32, #tpu.memory_space<vmem>>, vector<2x16xf32>,
    %c0_250 = arith.constant 0 : index
    %c3_251 = arith.constant 3 : index
    %c5_252 = arith.constant 5 : index
    %c0_253 = arith.constant 0 : index
    %159 = vector.load %arg1[%c0_250, %c3_251, %c5_252, %c0_253] : memref<2x4x16x16xf32, #tpu.memory_space<vmem>>, vector<2x1x1x16xf32>
    %160 = vector.shape_cast %159 : vector<2x1x1x16xf32> to vector<2x16xf32>
    %c0_254 = arith.constant 0 : index
    %c848 = arith.constant 848 : index
    %161 = vector.load %arg2[%c0_254, %c848] : memref<2x1024xf32, #tpu.memory_space<vmem>>, vector<2x16xf32>
    tpu.vector_store %arg2[%c0_254, %c848], %160 {strides = array<i32>} : memref<2x1024xf32, #tpu.memory_space<vmem>>, vector<2x16xf32>,
    %c0_255 = arith.constant 0 : index
    %c3_256 = arith.constant 3 : index
    %c6_257 = arith.constant 6 : index
    %c0_258 = arith.constant 0 : index
    %162 = vector.load %arg1[%c0_255, %c3_256, %c6_257, %c0_258] : memref<2x4x16x16xf32, #tpu.memory_space<vmem>>, vector<2x1x1x16xf32>
    %163 = vector.shape_cast %162 : vector<2x1x1x16xf32> to vector<2x16xf32>
    %c0_259 = arith.constant 0 : index
    %c864 = arith.constant 864 : index
    %164 = vector.load %arg2[%c0_259, %c864] : memref<2x1024xf32, #tpu.memory_space<vmem>>, vector<2x16xf32>
    tpu.vector_store %arg2[%c0_259, %c864], %163 {strides = array<i32>} : memref<2x1024xf32, #tpu.memory_space<vmem>>, vector<2x16xf32>,
    %c0_260 = arith.constant 0 : index
    %c3_261 = arith.constant 3 : index
    %c7_262 = arith.constant 7 : index
    %c0_263 = arith.constant 0 : index
    %165 = vector.load %arg1[%c0_260, %c3_261, %c7_262, %c0_263] : memref<2x4x16x16xf32, #tpu.memory_space<vmem>>, vector<2x1x1x16xf32>
    %166 = vector.shape_cast %165 : vector<2x1x1x16xf32> to vector<2x16xf32>
    %c0_264 = arith.constant 0 : index
    %c880 = arith.constant 880 : index
    %167 = vector.load %arg2[%c0_264, %c880] : memref<2x1024xf32, #tpu.memory_space<vmem>>, vector<2x16xf32>
    tpu.vector_store %arg2[%c0_264, %c880], %166 {strides = array<i32>} : memref<2x1024xf32, #tpu.memory_space<vmem>>, vector<2x16xf32>,
    %c0_265 = arith.constant 0 : index
    %c3_266 = arith.constant 3 : index
    %c8_267 = arith.constant 8 : index
    %c0_268 = arith.constant 0 : index
    %168 = vector.load %arg1[%c0_265, %c3_266, %c8_267, %c0_268] : memref<2x4x16x16xf32, #tpu.memory_space<vmem>>, vector<2x1x1x16xf32>
    %169 = vector.shape_cast %168 : vector<2x1x1x16xf32> to vector<2x16xf32>
    %c0_269 = arith.constant 0 : index
    %c896 = arith.constant 896 : index
    %170 = vector.load %arg2[%c0_269, %c896] : memref<2x1024xf32, #tpu.memory_space<vmem>>, vector<2x16xf32>
    tpu.vector_store %arg2[%c0_269, %c896], %169 {strides = array<i32>} : memref<2x1024xf32, #tpu.memory_space<vmem>>, vector<2x16xf32>,
    %c0_270 = arith.constant 0 : index
    %c3_271 = arith.constant 3 : index
    %c9_272 = arith.constant 9 : index
    %c0_273 = arith.constant 0 : index
    %171 = vector.load %arg1[%c0_270, %c3_271, %c9_272, %c0_273] : memref<2x4x16x16xf32, #tpu.memory_space<vmem>>, vector<2x1x1x16xf32>
    %172 = vector.shape_cast %171 : vector<2x1x1x16xf32> to vector<2x16xf32>
    %c0_274 = arith.constant 0 : index
    %c912 = arith.constant 912 : index
    %173 = vector.load %arg2[%c0_274, %c912] : memref<2x1024xf32, #tpu.memory_space<vmem>>, vector<2x16xf32>
    tpu.vector_store %arg2[%c0_274, %c912], %172 {strides = array<i32>} : memref<2x1024xf32, #tpu.memory_space<vmem>>, vector<2x16xf32>,
    %c0_275 = arith.constant 0 : index
    %c3_276 = arith.constant 3 : index
    %c10_277 = arith.constant 10 : index
    %c0_278 = arith.constant 0 : index
    %174 = vector.load %arg1[%c0_275, %c3_276, %c10_277, %c0_278] : memref<2x4x16x16xf32, #tpu.memory_space<vmem>>, vector<2x1x1x16xf32>
    %175 = vector.shape_cast %174 : vector<2x1x1x16xf32> to vector<2x16xf32>
    %c0_279 = arith.constant 0 : index
    %c928 = arith.constant 928 : index
    %176 = vector.load %arg2[%c0_279, %c928] : memref<2x1024xf32, #tpu.memory_space<vmem>>, vector<2x16xf32>
    tpu.vector_store %arg2[%c0_279, %c928], %175 {strides = array<i32>} : memref<2x1024xf32, #tpu.memory_space<vmem>>, vector<2x16xf32>,
    %c0_280 = arith.constant 0 : index
    %c3_281 = arith.constant 3 : index
    %c11_282 = arith.constant 11 : index
    %c0_283 = arith.constant 0 : index
    %177 = vector.load %arg1[%c0_280, %c3_281, %c11_282, %c0_283] : memref<2x4x16x16xf32, #tpu.memory_space<vmem>>, vector<2x1x1x16xf32>
    %178 = vector.shape_cast %177 : vector<2x1x1x16xf32> to vector<2x16xf32>
    %c0_284 = arith.constant 0 : index
    %c944 = arith.constant 944 : index
    %179 = vector.load %arg2[%c0_284, %c944] : memref<2x1024xf32, #tpu.memory_space<vmem>>, vector<2x16xf32>
    tpu.vector_store %arg2[%c0_284, %c944], %178 {strides = array<i32>} : memref<2x1024xf32, #tpu.memory_space<vmem>>, vector<2x16xf32>,
    %c0_285 = arith.constant 0 : index
    %c3_286 = arith.constant 3 : index
    %c12_287 = arith.constant 12 : index
    %c0_288 = arith.constant 0 : index
    %180 = vector.load %arg1[%c0_285, %c3_286, %c12_287, %c0_288] : memref<2x4x16x16xf32, #tpu.memory_space<vmem>>, vector<2x1x1x16xf32>
    %181 = vector.shape_cast %180 : vector<2x1x1x16xf32> to vector<2x16xf32>
    %c0_289 = arith.constant 0 : index
    %c960 = arith.constant 960 : index
    %182 = vector.load %arg2[%c0_289, %c960] : memref<2x1024xf32, #tpu.memory_space<vmem>>, vector<2x16xf32>
    tpu.vector_store %arg2[%c0_289, %c960], %181 {strides = array<i32>} : memref<2x1024xf32, #tpu.memory_space<vmem>>, vector<2x16xf32>,
    %c0_290 = arith.constant 0 : index
    %c3_291 = arith.constant 3 : index
    %c13_292 = arith.constant 13 : index
    %c0_293 = arith.constant 0 : index
    %183 = vector.load %arg1[%c0_290, %c3_291, %c13_292, %c0_293] : memref<2x4x16x16xf32, #tpu.memory_space<vmem>>, vector<2x1x1x16xf32>
    %184 = vector.shape_cast %183 : vector<2x1x1x16xf32> to vector<2x16xf32>
    %c0_294 = arith.constant 0 : index
    %c976 = arith.constant 976 : index
    %185 = vector.load %arg2[%c0_294, %c976] : memref<2x1024xf32, #tpu.memory_space<vmem>>, vector<2x16xf32>
    tpu.vector_store %arg2[%c0_294, %c976], %184 {strides = array<i32>} : memref<2x1024xf32, #tpu.memory_space<vmem>>, vector<2x16xf32>,
    %c0_295 = arith.constant 0 : index
    %c3_296 = arith.constant 3 : index
    %c14_297 = arith.constant 14 : index
    %c0_298 = arith.constant 0 : index
    %186 = vector.load %arg1[%c0_295, %c3_296, %c14_297, %c0_298] : memref<2x4x16x16xf32, #tpu.memory_space<vmem>>, vector<2x1x1x16xf32>
    %187 = vector.shape_cast %186 : vector<2x1x1x16xf32> to vector<2x16xf32>
    %c0_299 = arith.constant 0 : index
    %c992 = arith.constant 992 : index
    %188 = vector.load %arg2[%c0_299, %c992] : memref<2x1024xf32, #tpu.memory_space<vmem>>, vector<2x16xf32>
    tpu.vector_store %arg2[%c0_299, %c992], %187 {strides = array<i32>} : memref<2x1024xf32, #tpu.memory_space<vmem>>, vector<2x16xf32>,
    %c0_300 = arith.constant 0 : index
    %c3_301 = arith.constant 3 : index
    %c15_302 = arith.constant 15 : index
    %c0_303 = arith.constant 0 : index
    %189 = vector.load %arg1[%c0_300, %c3_301, %c15_302, %c0_303] : memref<2x4x16x16xf32, #tpu.memory_space<vmem>>, vector<2x1x1x16xf32>
    %190 = vector.shape_cast %189 : vector<2x1x1x16xf32> to vector<2x16xf32>
    %c0_304 = arith.constant 0 : index
    %c1008 = arith.constant 1008 : index
    %191 = vector.load %arg2[%c0_304, %c1008] : memref<2x1024xf32, #tpu.memory_space<vmem>>, vector<2x16xf32>
    tpu.vector_store %arg2[%c0_304, %c1008], %190 {strides = array<i32>} : memref<2x1024xf32, #tpu.memory_space<vmem>>, vector<2x16xf32>,
    return
  }
  func.func @transform_0(%arg0: i32) -> (i32, i32, i32, i32) {
    %c0_i32 = arith.constant 0 : i32
    %c0_i32_0 = arith.constant 0 : i32
    %c0_i32_1 = arith.constant 0 : i32
    %c0_i32_2 = arith.constant 0 : i32
    return %arg0, %c0_i32, %c0_i32_0, %c0_i32_1 : i32, i32, i32, i32
  }
  func.func @transform_1(%arg0: i32) -> (i32, i32) {
    %c0_i32 = arith.constant 0 : i32
    %c0_i32_0 = arith.constant 0 : i32
    return %arg0, %c0_i32 : i32, i32
  }
}

</mosaic_0001>

<llo_original>
// kernel: tpu_custom_call.1
$region0: #{tpu_custom_call.1}
  #allocation0 [shape = 'u32[]', space=smem, size = 0x4, offset = 0x4, fixed_abs, tag = 'smem constant byte address 0x4 - core index']
  #allocation1 [shape = 'u32[72,128]{1,0:T(1,128)}', space=vmem, size = 0x9000, scoped, tag = 'internal scratch']
  %s0 = inlined_call_operand.hbm [shape: f32[2,4,16,16], index: 0, kind: input, shape index: {}]
  %s1 = inlined_call_operand.hbm [shape: f32[2,1024], index: 1, kind: output, shape index: {}]
  %s2 = sld [smem:[#allocation0]]
  $region18: #{tpu_custom_call.1} parent=0
    _
  %s4 = ssub.s32 1, %s2
  %s5 = scalar_select 0, %s4, %s2
  $region1: #{tpu_custom_call.1} parent=0
    #allocation2 [shape = 'u8[65536]{0}', space=vmem, size = 0x10000, scoped, tag = 'input window, operand 0, single buffered']
    #allocation3 [shape = 's32[1]{0}', space=sflag, size = 0x4, scoped, tag = 'scoped memory for tpu_custom_call.1']
    #allocation4 [shape = 's32[1]{0}', space=sflag, size = 0x4, scoped, tag = 'scoped memory for tpu_custom_call.1']
    #allocation5 [shape = 'u8[8192]{0}', space=vmem, size = 0x2000, scoped, tag = 'output window, operand 0, single buffered']
    %6 = vsyncpa [#allocation3], 0
    %7 = vsyncpa [#allocation4], 0
    // Predicated region
    $region2: #{tpu_custom_call.1} parent=1 // pred_check
      _
    $region3: #{tpu_custom_call.1} parent=1 // pred_check_branch
      %9 = sbr.rel (0) target = $region5
    $region4: #{tpu_custom_call.1} parent=1 // pred_region
      %11 = vsyncadd [#allocation3], 0
      %s12 = sshll.u32 %s0, 4
      %s13 = int_to_ptr.hbm [resolvable:$true] %s12
      %s14 = sshll.u32 [#allocation2], 4
      %s15 = int_to_ptr.vmem [resolvable:$true] %s14
      %20 = dma.hbm_to_vmem [thread:$0]  %s13, 2048, %s15, [#allocation3], 128, 128, 8
    $region5: #{tpu_custom_call.1} parent=1 // pred_fallthru
      _
    // Predicated region
    $region6: #{tpu_custom_call.1} parent=1 // pred_check
      _
    $region7: #{tpu_custom_call.1} parent=1 // pred_check_branch
      %22 = sbr.rel (0) target = $region9
    $region8: #{tpu_custom_call.1} parent=1 // pred_region
      %24 = dma.done [#allocation3], 2048
    $region9: #{tpu_custom_call.1} parent=1 // pred_fallthru
      _
    %v25 = vld [vmem:[#allocation2] sm:$0x1]
    %v26 = vld [vmem:[#allocation2 + $0x40] sm:$0x1]
    %vm29 = vcmask 1044484
    %v30 = vsel %vm29, %v25, %v25
    %vm31 = vcmask 1046534
    %v32 = vsel %vm31, %v25, %v30
    %v33 = vrot.slane %v26, 7
    %vm34 = vcmask 1041409
    %v35 = vsel %vm34, %v33, %v32
    %vm36 = vcmask 1043459
    %v37 = vsel %vm36, %v33, %v35
    %vm38 = vcmask 1045509
    %v39 = vsel %vm38, %v33, %v37
    %vm40 = vcmask 1047559
    %v41 = vsel %vm40, %v33, %v39
    %vm43 = vcmask 123904
    %44 = vst.msk [vmem:[#allocation5] sm:$0x3] %vm43, %v41
    %v45 = vld [vmem:[#allocation2 + $0x1] sm:$0x1]
    %v46 = vld [vmem:[#allocation2 + $0x41] sm:$0x1]
    %v49 = vsel %vm29, %v45, %v45
    %v50 = vsel %vm31, %v45, %v49
    %v51 = vrot.slane %v46, 7
    %v52 = vsel %vm34, %v51, %v50
    %v53 = vsel %vm36, %v51, %v52
    %v54 = vsel %vm38, %v51, %v53
    %v55 = vsel %vm40, %v51, %v54
    %56 = vrot.lane.b32.xlu0 %v55, 16
    %v57 = vpop.permute.xlu0 %56
    %vm59 = vcmask 255104
    %60 = vst.msk [vmem:[#allocation5] sm:$0x3] %vm59, %v57
    %v61 = vld [vmem:[#allocation2 + $0x2] sm:$0x1]
    %v62 = vld [vmem:[#allocation2 + $0x42] sm:$0x1]
    %v65 = vsel %vm29, %v61, %v61
    %v66 = vsel %vm31, %v61, %v65
    %v67 = vrot.slane %v62, 7
    %v68 = vsel %vm34, %v67, %v66
    %v69 = vsel %vm36, %v67, %v68
    %v70 = vsel %vm38, %v67, %v69
    %v71 = vsel %vm40, %v67, %v70
    %72 = vrot.lane.b32.xlu0 %v71, 32
    %v73 = vpop.permute.xlu0 %72
    %vm75 = vcmask 386304
    %76 = vst.msk [vmem:[#allocation5] sm:$0x3] %vm75, %v73
    %v77 = vld [vmem:[#allocation2 + $0x3] sm:$0x1]
    %v78 = vld [vmem:[#allocation2 + $0x43] sm:$0x1]
    %v81 = vsel %vm29, %v77, %v77
    %v82 = vsel %vm31, %v77, %v81
    %v83 = vrot.slane %v78, 7
    %v84 = vsel %vm34, %v83, %v82
    %v85 = vsel %vm36, %v83, %v84
    %v86 = vsel %vm38, %v83, %v85
    %v87 = vsel %vm40, %v83, %v86
    %88 = vrot.lane.b32.xlu0 %v87, 48
    %v89 = vpop.permute.xlu0 %88
    %vm91 = vcmask 517504
    %92 = vst.msk [vmem:[#allocation5] sm:$0x3] %vm91, %v89
    %v93 = vld [vmem:[#allocation2 + $0x4] sm:$0x1]
    %v94 = vld [vmem:[#allocation2 + $0x44] sm:$0x1]
    %v97 = vsel %vm29, %v93, %v93
    %v98 = vsel %vm31, %v93, %v97
    %v99 = vrot.slane %v94, 7
    %v100 = vsel %vm34, %v99, %v98
    %v101 = vsel %vm36, %v99, %v100
    %v102 = vsel %vm38, %v99, %v101
    %v103 = vsel %vm40, %v99, %v102
    %104 = vrot.lane.b32.xlu0 %v103, 64
    %v105 = vpop.permute.xlu0 %104
    %vm107 = vcmask 648704
    %108 = vst.msk [vmem:[#allocation5] sm:$0x3] %vm107, %v105
    %v109 = vld [vmem:[#allocation2 + $0x5] sm:$0x1]
    %v110 = vld [vmem:[#allocation2 + $0x45] sm:$0x1]
    %v113 = vsel %vm29, %v109, %v109
    %v114 = vsel %vm31, %v109, %v113
    %v115 = vrot.slane %v110, 7
    %v116 = vsel %vm34, %v115, %v114
    %v117 = vsel %vm36, %v115, %v116
    %v118 = vsel %vm38, %v115, %v117
    %v119 = vsel %vm40, %v115, %v118
    %120 = vrot.lane.b32.xlu0 %v119, 80
    %v121 = vpop.permute.xlu0 %120
    %vm123 = vcmask 779904
    %124 = vst.msk [vmem:[#allocation5] sm:$0x3] %vm123, %v121
    %v125 = vld [vmem:[#allocation2 + $0x6] sm:$0x1]
    %v126 = vld [vmem:[#allocation2 + $0x46] sm:$0x1]
    %v129 = vsel %vm29, %v125, %v125
    %v130 = vsel %vm31, %v125, %v129
    %v131 = vrot.slane %v126, 7
    %v132 = vsel %vm34, %v131, %v130
    %v133 = vsel %vm36, %v131, %v132
    %v134 = vsel %vm38, %v131, %v133
    %v135 = vsel %vm40, %v131, %v134
    %136 = vrot.lane.b32.xlu0 %v135, 96
    %v137 = vpop.permute.xlu0 %136
    %vm139 = vcmask 911104
    %140 = vst.msk [vmem:[#allocation5] sm:$0x3] %vm139, %v137
    %v141 = vld [vmem:[#allocation2 + $0x7] sm:$0x1]
    %v142 = vld [vmem:[#allocation2 + $0x47] sm:$0x1]
    %v145 = vsel %vm29, %v141, %v141
    %v146 = vsel %vm31, %v141, %v145
    %v147 = vrot.slane %v142, 7
    %v148 = vsel %vm34, %v147, %v146
    %v149 = vsel %vm36, %v147, %v148
    %v150 = vsel %vm38, %v147, %v149
    %v151 = vsel %vm40, %v147, %v150
    %152 = vrot.lane.b32.xlu0 %v151, 112
    %v153 = vpop.permute.xlu0 %152
    %vm155 = vcmask 1042304
    %156 = vst.msk [vmem:[#allocation5] sm:$0x3] %vm155, %v153
    %v157 = vld [vmem:[#allocation2 + $0x8] sm:$0x1]
    %v158 = vld [vmem:[#allocation2 + $0x48] sm:$0x1]
    %v161 = vsel %vm29, %v157, %v157
    %v162 = vsel %vm31, %v157, %v161
    %v163 = vrot.slane %v158, 7
    %v164 = vsel %vm34, %v163, %v162
    %v165 = vsel %vm36, %v163, %v164
    %v166 = vsel %vm38, %v163, %v165
    %v167 = vsel %vm40, %v163, %v166
    %169 = vst.msk [vmem:[#allocation5 + $0x2] sm:$0x3] %vm43, %v167
    %v170 = vld [vmem:[#allocation2 + $0x9] sm:$0x1]
    %v171 = vld [vmem:[#allocation2 + $0x49] sm:$0x1]
    %v174 = vsel %vm29, %v170, %v170
    %v175 = vsel %vm31, %v170, %v174
    %v176 = vrot.slane %v171, 7
    %v177 = vsel %vm34, %v176, %v175
    %v178 = vsel %vm36, %v176, %v177
    %v179 = vsel %vm38, %v176, %v178
    %v180 = vsel %vm40, %v176, %v179
    %181 = vrot.lane.b32.xlu0 %v180, 16
    %v182 = vpop.permute.xlu0 %181
    %184 = vst.msk [vmem:[#allocation5 + $0x2] sm:$0x3] %vm59, %v182
    %v185 = vld [vmem:[#allocation2 + $0xa] sm:$0x1]
    %v186 = vld [vmem:[#allocation2 + $0x4a] sm:$0x1]
    %v189 = vsel %vm29, %v185, %v185
    %v190 = vsel %vm31, %v185, %v189
    %v191 = vrot.slane %v186, 7
    %v192 = vsel %vm34, %v191, %v190
    %v193 = vsel %vm36, %v191, %v192
    %v194 = vsel %vm38, %v191, %v193
    %v195 = vsel %vm40, %v191, %v194
    %196 = vrot.lane.b32.xlu0 %v195, 32
    %v197 = vpop.permute.xlu0 %196
    %199 = vst.msk [vmem:[#allocation5 + $0x2] sm:$0x3] %vm75, %v197
    %v200 = vld [vmem:[#allocation2 + $0xb] sm:$0x1]
    %v201 = vld [vmem:[#allocation2 + $0x4b] sm:$0x1]
    %v204 = vsel %vm29, %v200, %v200
    %v205 = vsel %vm31, %v200, %v204
    %v206 = vrot.slane %v201, 7
    %v207 = vsel %vm34, %v206, %v205
    %v208 = vsel %vm36, %v206, %v207
    %v209 = vsel %vm38, %v206, %v208
    %v210 = vsel %vm40, %v206, %v209
    %211 = vrot.lane.b32.xlu0 %v210, 48
    %v212 = vpop.permute.xlu0 %211
    %214 = vst.msk [vmem:[#allocation5 + $0x2] sm:$0x3] %vm91, %v212
    %v215 = vld [vmem:[#allocation2 + $0xc] sm:$0x1]
    %v216 = vld [vmem:[#allocation2 + $0x4c] sm:$0x1]
    %v219 = vsel %vm29, %v215, %v215
    %v220 = vsel %vm31, %v215, %v219
    %v221 = vrot.slane %v216, 7
    %v222 = vsel %vm34, %v221, %v220
    %v223 = vsel %vm36, %v221, %v222
    %v224 = vsel %vm38, %v221, %v223
    %v225 = vsel %vm40, %v221, %v224
    %226 = vrot.lane.b32.xlu0 %v225, 64
    %v227 = vpop.permute.xlu0 %226
    %229 = vst.msk [vmem:[#allocation5 + $0x2] sm:$0x3] %vm107, %v227
    %v230 = vld [vmem:[#allocation2 + $0xd] sm:$0x1]
    %v231 = vld [vmem:[#allocation2 + $0x4d] sm:$0x1]
    %v234 = vsel %vm29, %v230, %v230
    %v235 = vsel %vm31, %v230, %v234
    %v236 = vrot.slane %v231, 7
    %v237 = vsel %vm34, %v236, %v235
    %v238 = vsel %vm36, %v236, %v237
    %v239 = vsel %vm38, %v236, %v238
    %v240 = vsel %vm40, %v236, %v239
    %241 = vrot.lane.b32.xlu0 %v240, 80
    %v242 = vpop.permute.xlu0 %241
    %244 = vst.msk [vmem:[#allocation5 + $0x2] sm:$0x3] %vm123, %v242
    %v245 = vld [vmem:[#allocation2 + $0xe] sm:$0x1]
    %v246 = vld [vmem:[#allocation2 + $0x4e] sm:$0x1]
    %v249 = vsel %vm29, %v245, %v245
    %v250 = vsel %vm31, %v245, %v249
    %v251 = vrot.slane %v246, 7
    %v252 = vsel %vm34, %v251, %v250
    %v253 = vsel %vm36, %v251, %v252
    %v254 = vsel %vm38, %v251, %v253
    %v255 = vsel %vm40, %v251, %v254
    %256 = vrot.lane.b32.xlu0 %v255, 96
    %v257 = vpop.permute.xlu0 %256
    %259 = vst.msk [vmem:[#allocation5 + $0x2] sm:$0x3] %vm139, %v257
    %v260 = vld [vmem:[#allocation2 + $0xf] sm:$0x1]
    %v261 = vld [vmem:[#allocation2 + $0x4f] sm:$0x1]
    %v264 = vsel %vm29, %v260, %v260
    %v265 = vsel %vm31, %v260, %v264
    %v266 = vrot.slane %v261, 7
    %v267 = vsel %vm34, %v266, %v265
    %v268 = vsel %vm36, %v266, %v267
    %v269 = vsel %vm38, %v266, %v268
    %v270 = vsel %vm40, %v266, %v269
    %271 = vrot.lane.b32.xlu0 %v270, 112
    %v272 = vpop.permute.xlu0 %271
    %274 = vst.msk [vmem:[#allocation5 + $0x2] sm:$0x3] %vm155, %v272
    %s275 = scalar_lea.vmem [#allocation2], 16
    %v276 = vld [vmem:[%s275] sm:$0x1]
    %v277 = vld [vmem:[%s275 + $0x40] sm:$0x1]
    %v280 = vsel %vm29, %v276, %v276
    %v281 = vsel %vm31, %v276, %v280
    %v282 = vrot.slane %v277, 7
    %v283 = vsel %vm34, %v282, %v281
    %v284 = vsel %vm36, %v282, %v283
    %v285 = vsel %vm38, %v282, %v284
    %v286 = vsel %vm40, %v282, %v285
    %288 = vst.msk [vmem:[#allocation5 + $0x4] sm:$0x3] %vm43, %v286
    %v289 = vld [vmem:[%s275 + $0x1] sm:$0x1]
    %v290 = vld [vmem:[%s275 + $0x41] sm:$0x1]
    %v293 = vsel %vm29, %v289, %v289
    %v294 = vsel %vm31, %v289, %v293
    %v295 = vrot.slane %v290, 7
    %v296 = vsel %vm34, %v295, %v294
    %v297 = vsel %vm36, %v295, %v296
    %v298 = vsel %vm38, %v295, %v297
    %v299 = vsel %vm40, %v295, %v298
    %300 = vrot.lane.b32.xlu0 %v299, 16
    %v301 = vpop.permute.xlu0 %300
    %303 = vst.msk [vmem:[#allocation5 + $0x4] sm:$0x3] %vm59, %v301
    %v304 = vld [vmem:[%s275 + $0x2] sm:$0x1]
    %v305 = vld [vmem:[%s275 + $0x42] sm:$0x1]
    %v308 = vsel %vm29, %v304, %v304
    %v309 = vsel %vm31, %v304, %v308
    %v310 = vrot.slane %v305, 7
    %v311 = vsel %vm34, %v310, %v309
    %v312 = vsel %vm36, %v310, %v311
    %v313 = vsel %vm38, %v310, %v312
    %v314 = vsel %vm40, %v310, %v313
    %315 = vrot.lane.b32.xlu0 %v314, 32
    %v316 = vpop.permute.xlu0 %315
    %318 = vst.msk [vmem:[#allocation5 + $0x4] sm:$0x3] %vm75, %v316
    %v319 = vld [vmem:[%s275 + $0x3] sm:$0x1]
    %v320 = vld [vmem:[%s275 + $0x43] sm:$0x1]
    %v323 = vsel %vm29, %v319, %v319
    %v324 = vsel %vm31, %v319, %v323
    %v325 = vrot.slane %v320, 7
    %v326 = vsel %vm34, %v325, %v324
    %v327 = vsel %vm36, %v325, %v326
    %v328 = vsel %vm38, %v325, %v327
    %v329 = vsel %vm40, %v325, %v328
    %330 = vrot.lane.b32.xlu0 %v329, 48
    %v331 = vpop.permute.xlu0 %330
    %333 = vst.msk [vmem:[#allocation5 + $0x4] sm:$0x3] %vm91, %v331
    %v334 = vld [vmem:[%s275 + $0x4] sm:$0x1]
    %v335 = vld [vmem:[%s275 + $0x44] sm:$0x1]
    %v338 = vsel %vm29, %v334, %v334
    %v339 = vsel %vm31, %v334, %v338
    %v340 = vrot.slane %v335, 7
    %v341 = vsel %vm34, %v340, %v339
    %v342 = vsel %vm36, %v340, %v341
    %v343 = vsel %vm38, %v340, %v342
    %v344 = vsel %vm40, %v340, %v343
    %345 = vrot.lane.b32.xlu0 %v344, 64
    %v346 = vpop.permute.xlu0 %345
    %348 = vst.msk [vmem:[#allocation5 + $0x4] sm:$0x3] %vm107, %v346
    %v349 = vld [vmem:[%s275 + $0x5] sm:$0x1]
    %v350 = vld [vmem:[%s275 + $0x45] sm:$0x1]
    %v353 = vsel %vm29, %v349, %v349
    %v354 = vsel %vm31, %v349, %v353
    %v355 = vrot.slane %v350, 7
    %v356 = vsel %vm34, %v355, %v354
    %v357 = vsel %vm36, %v355, %v356
    %v358 = vsel %vm38, %v355, %v357
    %v359 = vsel %vm40, %v355, %v358
    %360 = vrot.lane.b32.xlu0 %v359, 80
    %v361 = vpop.permute.xlu0 %360
    %363 = vst.msk [vmem:[#allocation5 + $0x4] sm:$0x3] %vm123, %v361
    %v364 = vld [vmem:[%s275 + $0x6] sm:$0x1]
    %v365 = vld [vmem:[%s275 + $0x46] sm:$0x1]
    %v368 = vsel %vm29, %v364, %v364
    %v369 = vsel %vm31, %v364, %v368
    %v370 = vrot.slane %v365, 7
    %v371 = vsel %vm34, %v370, %v369
    %v372 = vsel %vm36, %v370, %v371
    %v373 = vsel %vm38, %v370, %v372
    %v374 = vsel %vm40, %v370, %v373
    %375 = vrot.lane.b32.xlu0 %v374, 96
    %v376 = vpop.permute.xlu0 %375
    %378 = vst.msk [vmem:[#allocation5 + $0x4] sm:$0x3] %vm139, %v376
    %v379 = vld [vmem:[%s275 + $0x7] sm:$0x1]
    %v380 = vld [vmem:[%s275 + $0x47] sm:$0x1]
    %v383 = vsel %vm29, %v379, %v379
    %v384 = vsel %vm31, %v379, %v383
    %v385 = vrot.slane %v380, 7
    %v386 = vsel %vm34, %v385, %v384
    %v387 = vsel %vm36, %v385, %v386
    %v388 = vsel %vm38, %v385, %v387
    %v389 = vsel %vm40, %v385, %v388
    %390 = vrot.lane.b32.xlu0 %v389, 112
    %v391 = vpop.permute.xlu0 %390
    %393 = vst.msk [vmem:[#allocation5 + $0x4] sm:$0x3] %vm155, %v391
    %v394 = vld [vmem:[%s275 + $0x8] sm:$0x1]
    %v395 = vld [vmem:[%s275 + $0x48] sm:$0x1]
    %v398 = vsel %vm29, %v394, %v394
    %v399 = vsel %vm31, %v394, %v398
    %v400 = vrot.slane %v395, 7
    %v401 = vsel %vm34, %v400, %v399
    %v402 = vsel %vm36, %v400, %v401
    %v403 = vsel %vm38, %v400, %v402
    %v404 = vsel %vm40, %v400, %v403
    %406 = vst.msk [vmem:[#allocation5 + $0x6] sm:$0x3] %vm43, %v404
    %v407 = vld [vmem:[%s275 + $0x9] sm:$0x1]
    %v408 = vld [vmem:[%s275 + $0x49] sm:$0x1]
    %v411 = vsel %vm29, %v407, %v407
    %v412 = vsel %vm31, %v407, %v411
    %v413 = vrot.slane %v408, 7
    %v414 = vsel %vm34, %v413, %v412
    %v415 = vsel %vm36, %v413, %v414
    %v416 = vsel %vm38, %v413, %v415
    %v417 = vsel %vm40, %v413, %v416
    %418 = vrot.lane.b32.xlu0 %v417, 16
    %v419 = vpop.permute.xlu0 %418
    %421 = vst.msk [vmem:[#allocation5 + $0x6] sm:$0x3] %vm59, %v419
    %v422 = vld [vmem:[%s275 + $0xa] sm:$0x1]
    %v423 = vld [vmem:[%s275 + $0x4a] sm:$0x1]
    %v426 = vsel %vm29, %v422, %v422
    %v427 = vsel %vm31, %v422, %v426
    %v428 = vrot.slane %v423, 7
    %v429 = vsel %vm34, %v428, %v427
    %v430 = vsel %vm36, %v428, %v429
    %v431 = vsel %vm38, %v428, %v430
    %v432 = vsel %vm40, %v428, %v431
    %433 = vrot.lane.b32.xlu0 %v432, 32
    %v434 = vpop.permute.xlu0 %433
    %436 = vst.msk [vmem:[#allocation5 + $0x6] sm:$0x3] %vm75, %v434
    %v437 = vld [vmem:[%s275 + $0xb] sm:$0x1]
    %v438 = vld [vmem:[%s275 + $0x4b] sm:$0x1]
    %v441 = vsel %vm29, %v437, %v437
    %v442 = vsel %vm31, %v437, %v441
    %v443 = vrot.slane %v438, 7
    %v444 = vsel %vm34, %v443, %v442
    %v445 = vsel %vm36, %v443, %v444
    %v446 = vsel %vm38, %v443, %v445
    %v447 = vsel %vm40, %v443, %v446
    %448 = vrot.lane.b32.xlu0 %v447, 48
    %v449 = vpop.permute.xlu0 %448
    %451 = vst.msk [vmem:[#allocation5 + $0x6] sm:$0x3] %vm91, %v449
    %v452 = vld [vmem:[%s275 + $0xc] sm:$0x1]
    %v453 = vld [vmem:[%s275 + $0x4c] sm:$0x1]
    %v456 = vsel %vm29, %v452, %v452
    %v457 = vsel %vm31, %v452, %v456
    %v458 = vrot.slane %v453, 7
    %v459 = vsel %vm34, %v458, %v457
    %v460 = vsel %vm36, %v458, %v459
    %v461 = vsel %vm38, %v458, %v460
    %v462 = vsel %vm40, %v458, %v461
    %463 = vrot.lane.b32.xlu0 %v462, 64
    %v464 = vpop.permute.xlu0 %463
    %466 = vst.msk [vmem:[#allocation5 + $0x6] sm:$0x3] %vm107, %v464
    %v467 = vld [vmem:[%s275 + $0xd] sm:$0x1]
    %v468 = vld [vmem:[%s275 + $0x4d] sm:$0x1]
    %v471 = vsel %vm29, %v467, %v467
    %v472 = vsel %vm31, %v467, %v471
    %v473 = vrot.slane %v468, 7
    %v474 = vsel %vm34, %v473, %v472
    %v475 = vsel %vm36, %v473, %v474
    %v476 = vsel %vm38, %v473, %v475
    %v477 = vsel %vm40, %v473, %v476
    %478 = vrot.lane.b32.xlu0 %v477, 80
    %v479 = vpop.permute.xlu0 %478
    %481 = vst.msk [vmem:[#allocation5 + $0x6] sm:$0x3] %vm123, %v479
    %v482 = vld [vmem:[%s275 + $0xe] sm:$0x1]
    %v483 = vld [vmem:[%s275 + $0x4e] sm:$0x1]
    %v486 = vsel %vm29, %v482, %v482
    %v487 = vsel %vm31, %v482, %v486
    %v488 = vrot.slane %v483, 7
    %v489 = vsel %vm34, %v488, %v487
    %v490 = vsel %vm36, %v488, %v489
    %v491 = vsel %vm38, %v488, %v490
    %v492 = vsel %vm40, %v488, %v491
    %493 = vrot.lane.b32.xlu0 %v492, 96
    %v494 = vpop.permute.xlu0 %493
    %496 = vst.msk [vmem:[#allocation5 + $0x6] sm:$0x3] %vm139, %v494
    %v497 = vld [vmem:[%s275 + $0xf] sm:$0x1]
    %v498 = vld [vmem:[%s275 + $0x4f] sm:$0x1]
    %v501 = vsel %vm29, %v497, %v497
    %v502 = vsel %vm31, %v497, %v501
    %v503 = vrot.slane %v498, 7
    %v504 = vsel %vm34, %v503, %v502
    %v505 = vsel %vm36, %v503, %v504
    %v506 = vsel %vm38, %v503, %v505
    %v507 = vsel %vm40, %v503, %v506
    %508 = vrot.lane.b32.xlu0 %v507, 112
    %v509 = vpop.permute.xlu0 %508
    %511 = vst.msk [vmem:[#allocation5 + $0x6] sm:$0x3] %vm155, %v509
    %s512 = scalar_lea.vmem [#allocation2], 32
    %v513 = vld [vmem:[%s512] sm:$0x1]
    %v514 = vld [vmem:[%s512 + $0x40] sm:$0x1]
    %v517 = vsel %vm29, %v513, %v513
    %v518 = vsel %vm31, %v513, %v517
    %v519 = vrot.slane %v514, 7
    %v520 = vsel %vm34, %v519, %v518
    %v521 = vsel %vm36, %v519, %v520
    %v522 = vsel %vm38, %v519, %v521
    %v523 = vsel %vm40, %v519, %v522
    %525 = vst.msk [vmem:[#allocation5 + $0x8] sm:$0x3] %vm43, %v523
    %v526 = vld [vmem:[%s512 + $0x1] sm:$0x1]
    %v527 = vld [vmem:[%s512 + $0x41] sm:$0x1]
    %v530 = vsel %vm29, %v526, %v526
    %v531 = vsel %vm31, %v526, %v530
    %v532 = vrot.slane %v527, 7
    %v533 = vsel %vm34, %v532, %v531
    %v534 = vsel %vm36, %v532, %v533
    %v535 = vsel %vm38, %v532, %v534
    %v536 = vsel %vm40, %v532, %v535
    %537 = vrot.lane.b32.xlu0 %v536, 16
    %v538 = vpop.permute.xlu0 %537
    %540 = vst.msk [vmem:[#allocation5 + $0x8] sm:$0x3] %vm59, %v538
    %v541 = vld [vmem:[%s512 + $0x2] sm:$0x1]
    %v542 = vld [vmem:[%s512 + $0x42] sm:$0x1]
    %v545 = vsel %vm29, %v541, %v541
    %v546 = vsel %vm31, %v541, %v545
    %v547 = vrot.slane %v542, 7
    %v548 = vsel %vm34, %v547, %v546
    %v549 = vsel %vm36, %v547, %v548
    %v550 = vsel %vm38, %v547, %v549
    %v551 = vsel %vm40, %v547, %v550
    %552 = vrot.lane.b32.xlu0 %v551, 32
    %v553 = vpop.permute.xlu0 %552
    %555 = vst.msk [vmem:[#allocation5 + $0x8] sm:$0x3] %vm75, %v553
    %v556 = vld [vmem:[%s512 + $0x3] sm:$0x1]
    %v557 = vld [vmem:[%s512 + $0x43] sm:$0x1]
    %v560 = vsel %vm29, %v556, %v556
    %v561 = vsel %vm31, %v556, %v560
    %v562 = vrot.slane %v557, 7
    %v563 = vsel %vm34, %v562, %v561
    %v564 = vsel %vm36, %v562, %v563
    %v565 = vsel %vm38, %v562, %v564
    %v566 = vsel %vm40, %v562, %v565
    %567 = vrot.lane.b32.xlu0 %v566, 48
    %v568 = vpop.permute.xlu0 %567
    %570 = vst.msk [vmem:[#allocation5 + $0x8] sm:$0x3] %vm91, %v568
    %v571 = vld [vmem:[%s512 + $0x4] sm:$0x1]
    %v572 = vld [vmem:[%s512 + $0x44] sm:$0x1]
    %v575 = vsel %vm29, %v571, %v571
    %v576 = vsel %vm31, %v571, %v575
    %v577 = vrot.slane %v572, 7
    %v578 = vsel %vm34, %v577, %v576
    %v579 = vsel %vm36, %v577, %v578
    %v580 = vsel %vm38, %v577, %v579
    %v581 = vsel %vm40, %v577, %v580
    %582 = vrot.lane.b32.xlu0 %v581, 64
    %v583 = vpop.permute.xlu0 %582
    %585 = vst.msk [vmem:[#allocation5 + $0x8] sm:$0x3] %vm107, %v583
    %v586 = vld [vmem:[%s512 + $0x5] sm:$0x1]
    %v587 = vld [vmem:[%s512 + $0x45] sm:$0x1]
    %v590 = vsel %vm29, %v586, %v586
    %v591 = vsel %vm31, %v586, %v590
    %v592 = vrot.slane %v587, 7
    %v593 = vsel %vm34, %v592, %v591
    %v594 = vsel %vm36, %v592, %v593
    %v595 = vsel %vm38, %v592, %v594
    %v596 = vsel %vm40, %v592, %v595
    %597 = vrot.lane.b32.xlu0 %v596, 80
    %v598 = vpop.permute.xlu0 %597
    %600 = vst.msk [vmem:[#allocation5 + $0x8] sm:$0x3] %vm123, %v598
    %v601 = vld [vmem:[%s512 + $0x6] sm:$0x1]
    %v602 = vld [vmem:[%s512 + $0x46] sm:$0x1]
    %v605 = vsel %vm29, %v601, %v601
    %v606 = vsel %vm31, %v601, %v605
    %v607 = vrot.slane %v602, 7
    %v608 = vsel %vm34, %v607, %v606
    %v609 = vsel %vm36, %v607, %v608
    %v610 = vsel %vm38, %v607, %v609
    %v611 = vsel %vm40, %v607, %v610
    %612 = vrot.lane.b32.xlu0 %v611, 96
    %v613 = vpop.permute.xlu0 %612
    %615 = vst.msk [vmem:[#allocation5 + $0x8] sm:$0x3] %vm139, %v613
    %v616 = vld [vmem:[%s512 + $0x7] sm:$0x1]
    %v617 = vld [vmem:[%s512 + $0x47] sm:$0x1]
    %v620 = vsel %vm29, %v616, %v616
    %v621 = vsel %vm31, %v616, %v620
    %v622 = vrot.slane %v617, 7
    %v623 = vsel %vm34, %v622, %v621
    %v624 = vsel %vm36, %v622, %v623
    %v625 = vsel %vm38, %v622, %v624
    %v626 = vsel %vm40, %v622, %v625
    %627 = vrot.lane.b32.xlu0 %v626, 112
    %v628 = vpop.permute.xlu0 %627
    %630 = vst.msk [vmem:[#allocation5 + $0x8] sm:$0x3] %vm155, %v628
    %v631 = vld [vmem:[%s512 + $0x8] sm:$0x1]
    %v632 = vld [vmem:[%s512 + $0x48] sm:$0x1]
    %v635 = vsel %vm29, %v631, %v631
    %v636 = vsel %vm31, %v631, %v635
    %v637 = vrot.slane %v632, 7
    %v638 = vsel %vm34, %v637, %v636
    %v639 = vsel %vm36, %v637, %v638
    %v640 = vsel %vm38, %v637, %v639
    %v641 = vsel %vm40, %v637, %v640
    %643 = vst.msk [vmem:[#allocation5 + $0xa] sm:$0x3] %vm43, %v641
    %v644 = vld [vmem:[%s512 + $0x9] sm:$0x1]
    %v645 = vld [vmem:[%s512 + $0x49] sm:$0x1]
    %v648 = vsel %vm29, %v644, %v644
    %v649 = vsel %vm31, %v644, %v648
    %v650 = vrot.slane %v645, 7
    %v651 = vsel %vm34, %v650, %v649
    %v652 = vsel %vm36, %v650, %v651
    %v653 = vsel %vm38, %v650, %v652
    %v654 = vsel %vm40, %v650, %v653
    %655 = vrot.lane.b32.xlu0 %v654, 16
    %v656 = vpop.permute.xlu0 %655
    %658 = vst.msk [vmem:[#allocation5 + $0xa] sm:$0x3] %vm59, %v656
    %v659 = vld [vmem:[%s512 + $0xa] sm:$0x1]
    %v660 = vld [vmem:[%s512 + $0x4a] sm:$0x1]
    %v663 = vsel %vm29, %v659, %v659
    %v664 = vsel %vm31, %v659, %v663
    %v665 = vrot.slane %v660, 7
    %v666 = vsel %vm34, %v665, %v664
    %v667 = vsel %vm36, %v665, %v666
    %v668 = vsel %vm38, %v665, %v667
    %v669 = vsel %vm40, %v665, %v668
    %670 = vrot.lane.b32.xlu0 %v669, 32
    %v671 = vpop.permute.xlu0 %670
    %673 = vst.msk [vmem:[#allocation5 + $0xa] sm:$0x3] %vm75, %v671
    %v674 = vld [vmem:[%s512 + $0xb] sm:$0x1]
    %v675 = vld [vmem:[%s512 + $0x4b] sm:$0x1]
    %v678 = vsel %vm29, %v674, %v674
    %v679 = vsel %vm31, %v674, %v678
    %v680 = vrot.slane %v675, 7
    %v681 = vsel %vm34, %v680, %v679
    %v682 = vsel %vm36, %v680, %v681
    %v683 = vsel %vm38, %v680, %v682
    %v684 = vsel %vm40, %v680, %v683
    %685 = vrot.lane.b32.xlu0 %v684, 48
    %v686 = vpop.permute.xlu0 %685
    %688 = vst.msk [vmem:[#allocation5 + $0xa] sm:$0x3] %vm91, %v686
    %v689 = vld [vmem:[%s512 + $0xc] sm:$0x1]
    %v690 = vld [vmem:[%s512 + $0x4c] sm:$0x1]
    %v693 = vsel %vm29, %v689, %v689
    %v694 = vsel %vm31, %v689, %v693
    %v695 = vrot.slane %v690, 7
    %v696 = vsel %vm34, %v695, %v694
    %v697 = vsel %vm36, %v695, %v696
    %v698 = vsel %vm38, %v695, %v697
    %v699 = vsel %vm40, %v695, %v698
    %700 = vrot.lane.b32.xlu0 %v699, 64
    %v701 = vpop.permute.xlu0 %700
    %703 = vst.msk [vmem:[#allocation5 + $0xa] sm:$0x3] %vm107, %v701
    %v704 = vld [vmem:[%s512 + $0xd] sm:$0x1]
    %v705 = vld [vmem:[%s512 + $0x4d] sm:$0x1]
    %v708 = vsel %vm29, %v704, %v704
    %v709 = vsel %vm31, %v704, %v708
    %v710 = vrot.slane %v705, 7
    %v711 = vsel %vm34, %v710, %v709
    %v712 = vsel %vm36, %v710, %v711
    %v713 = vsel %vm38, %v710, %v712
    %v714 = vsel %vm40, %v710, %v713
    %715 = vrot.lane.b32.xlu0 %v714, 80
    %v716 = vpop.permute.xlu0 %715
    %718 = vst.msk [vmem:[#allocation5 + $0xa] sm:$0x3] %vm123, %v716
    %v719 = vld [vmem:[%s512 + $0xe] sm:$0x1]
    %v720 = vld [vmem:[%s512 + $0x4e] sm:$0x1]
    %v723 = vsel %vm29, %v719, %v719
    %v724 = vsel %vm31, %v719, %v723
    %v725 = vrot.slane %v720, 7
    %v726 = vsel %vm34, %v725, %v724
    %v727 = vsel %vm36, %v725, %v726
    %v728 = vsel %vm38, %v725, %v727
    %v729 = vsel %vm40, %v725, %v728
    %730 = vrot.lane.b32.xlu0 %v729, 96
    %v731 = vpop.permute.xlu0 %730
    %733 = vst.msk [vmem:[#allocation5 + $0xa] sm:$0x3] %vm139, %v731
    %v734 = vld [vmem:[%s512 + $0xf] sm:$0x1]
    %v735 = vld [vmem:[%s512 + $0x4f] sm:$0x1]
    %v738 = vsel %vm29, %v734, %v734
    %v739 = vsel %vm31, %v734, %v738
    %v740 = vrot.slane %v735, 7
    %v741 = vsel %vm34, %v740, %v739
    %v742 = vsel %vm36, %v740, %v741
    %v743 = vsel %vm38, %v740, %v742
    %v744 = vsel %vm40, %v740, %v743
    %745 = vrot.lane.b32.xlu0 %v744, 112
    %v746 = vpop.permute.xlu0 %745
    %748 = vst.msk [vmem:[#allocation5 + $0xa] sm:$0x3] %vm155, %v746
    %s749 = scalar_lea.vmem [#allocation2], 48
    %v750 = vld [vmem:[%s749] sm:$0x1]
    %v751 = vld [vmem:[%s749 + $0x40] sm:$0x1]
    %v754 = vsel %vm29, %v750, %v750
    %v755 = vsel %vm31, %v750, %v754
    %v756 = vrot.slane %v751, 7
    %v757 = vsel %vm34, %v756, %v755
    %v758 = vsel %vm36, %v756, %v757
    %v759 = vsel %vm38, %v756, %v758
    %v760 = vsel %vm40, %v756, %v759
    %762 = vst.msk [vmem:[#allocation5 + $0xc] sm:$0x3] %vm43, %v760
    %v763 = vld [vmem:[%s749 + $0x1] sm:$0x1]
    %v764 = vld [vmem:[%s749 + $0x41] sm:$0x1]
    %v767 = vsel %vm29, %v763, %v763
    %v768 = vsel %vm31, %v763, %v767
    %v769 = vrot.slane %v764, 7
    %v770 = vsel %vm34, %v769, %v768
    %v771 = vsel %vm36, %v769, %v770
    %v772 = vsel %vm38, %v769, %v771
    %v773 = vsel %vm40, %v769, %v772
    %774 = vrot.lane.b32.xlu0 %v773, 16
    %v775 = vpop.permute.xlu0 %774
    %777 = vst.msk [vmem:[#allocation5 + $0xc] sm:$0x3] %vm59, %v775
    %v778 = vld [vmem:[%s749 + $0x2] sm:$0x1]
    %v779 = vld [vmem:[%s749 + $0x42] sm:$0x1]
    %v782 = vsel %vm29, %v778, %v778
    %v783 = vsel %vm31, %v778, %v782
    %v784 = vrot.slane %v779, 7
    %v785 = vsel %vm34, %v784, %v783
    %v786 = vsel %vm36, %v784, %v785
    %v787 = vsel %vm38, %v784, %v786
    %v788 = vsel %vm40, %v784, %v787
    %789 = vrot.lane.b32.xlu0 %v788, 32
    %v790 = vpop.permute.xlu0 %789
    %792 = vst.msk [vmem:[#allocation5 + $0xc] sm:$0x3] %vm75, %v790
    %v793 = vld [vmem:[%s749 + $0x3] sm:$0x1]
    %v794 = vld [vmem:[%s749 + $0x43] sm:$0x1]
    %v797 = vsel %vm29, %v793, %v793
    %v798 = vsel %vm31, %v793, %v797
    %v799 = vrot.slane %v794, 7
    %v800 = vsel %vm34, %v799, %v798
    %v801 = vsel %vm36, %v799, %v800
    %v802 = vsel %vm38, %v799, %v801
    %v803 = vsel %vm40, %v799, %v802
    %804 = vrot.lane.b32.xlu0 %v803, 48
    %v805 = vpop.permute.xlu0 %804
    %807 = vst.msk [vmem:[#allocation5 + $0xc] sm:$0x3] %vm91, %v805
    %v808 = vld [vmem:[%s749 + $0x4] sm:$0x1]
    %v809 = vld [vmem:[%s749 + $0x44] sm:$0x1]
    %v812 = vsel %vm29, %v808, %v808
    %v813 = vsel %vm31, %v808, %v812
    %v814 = vrot.slane %v809, 7
    %v815 = vsel %vm34, %v814, %v813
    %v816 = vsel %vm36, %v814, %v815
    %v817 = vsel %vm38, %v814, %v816
    %v818 = vsel %vm40, %v814, %v817
    %819 = vrot.lane.b32.xlu0 %v818, 64
    %v820 = vpop.permute.xlu0 %819
    %822 = vst.msk [vmem:[#allocation5 + $0xc] sm:$0x3] %vm107, %v820
    %v823 = vld [vmem:[%s749 + $0x5] sm:$0x1]
    %v824 = vld [vmem:[%s749 + $0x45] sm:$0x1]
    %v827 = vsel %vm29, %v823, %v823
    %v828 = vsel %vm31, %v823, %v827
    %v829 = vrot.slane %v824, 7
    %v830 = vsel %vm34, %v829, %v828
    %v831 = vsel %vm36, %v829, %v830
    %v832 = vsel %vm38, %v829, %v831
    %v833 = vsel %vm40, %v829, %v832
    %834 = vrot.lane.b32.xlu0 %v833, 80
    %v835 = vpop.permute.xlu0 %834
    %837 = vst.msk [vmem:[#allocation5 + $0xc] sm:$0x3] %vm123, %v835
    %v838 = vld [vmem:[%s749 + $0x6] sm:$0x1]
    %v839 = vld [vmem:[%s749 + $0x46] sm:$0x1]
    %v842 = vsel %vm29, %v838, %v838
    %v843 = vsel %vm31, %v838, %v842
    %v844 = vrot.slane %v839, 7
    %v845 = vsel %vm34, %v844, %v843
    %v846 = vsel %vm36, %v844, %v845
    %v847 = vsel %vm38, %v844, %v846
    %v848 = vsel %vm40, %v844, %v847
    %849 = vrot.lane.b32.xlu0 %v848, 96
    %v850 = vpop.permute.xlu0 %849
    %852 = vst.msk [vmem:[#allocation5 + $0xc] sm:$0x3] %vm139, %v850
    %v853 = vld [vmem:[%s749 + $0x7] sm:$0x1]
    %v854 = vld [vmem:[%s749 + $0x47] sm:$0x1]
    %v857 = vsel %vm29, %v853, %v853
    %v858 = vsel %vm31, %v853, %v857
    %v859 = vrot.slane %v854, 7
    %v860 = vsel %vm34, %v859, %v858
    %v861 = vsel %vm36, %v859, %v860
    %v862 = vsel %vm38, %v859, %v861
    %v863 = vsel %vm40, %v859, %v862
    %864 = vrot.lane.b32.xlu0 %v863, 112
    %v865 = vpop.permute.xlu0 %864
    %867 = vst.msk [vmem:[#allocation5 + $0xc] sm:$0x3] %vm155, %v865
    %v868 = vld [vmem:[%s749 + $0x8] sm:$0x1]
    %v869 = vld [vmem:[%s749 + $0x48] sm:$0x1]
    %v872 = vsel %vm29, %v868, %v868
    %v873 = vsel %vm31, %v868, %v872
    %v874 = vrot.slane %v869, 7
    %v875 = vsel %vm34, %v874, %v873
    %v876 = vsel %vm36, %v874, %v875
    %v877 = vsel %vm38, %v874, %v876
    %v878 = vsel %vm40, %v874, %v877
    %880 = vst.msk [vmem:[#allocation5 + $0xe] sm:$0x3] %vm43, %v878
    %v881 = vld [vmem:[%s749 + $0x9] sm:$0x1]
    %v882 = vld [vmem:[%s749 + $0x49] sm:$0x1]
    %v885 = vsel %vm29, %v881, %v881
    %v886 = vsel %vm31, %v881, %v885
    %v887 = vrot.slane %v882, 7
    %v888 = vsel %vm34, %v887, %v886
    %v889 = vsel %vm36, %v887, %v888
    %v890 = vsel %vm38, %v887, %v889
    %v891 = vsel %vm40, %v887, %v890
    %892 = vrot.lane.b32.xlu0 %v891, 16
    %v893 = vpop.permute.xlu0 %892
    %895 = vst.msk [vmem:[#allocation5 + $0xe] sm:$0x3] %vm59, %v893
    %v896 = vld [vmem:[%s749 + $0xa] sm:$0x1]
    %v897 = vld [vmem:[%s749 + $0x4a] sm:$0x1]
    %v900 = vsel %vm29, %v896, %v896
    %v901 = vsel %vm31, %v896, %v900
    %v902 = vrot.slane %v897, 7
    %v903 = vsel %vm34, %v902, %v901
    %v904 = vsel %vm36, %v902, %v903
    %v905 = vsel %vm38, %v902, %v904
    %v906 = vsel %vm40, %v902, %v905
    %907 = vrot.lane.b32.xlu0 %v906, 32
    %v908 = vpop.permute.xlu0 %907
    %910 = vst.msk [vmem:[#allocation5 + $0xe] sm:$0x3] %vm75, %v908
    %v911 = vld [vmem:[%s749 + $0xb] sm:$0x1]
    %v912 = vld [vmem:[%s749 + $0x4b] sm:$0x1]
    %v915 = vsel %vm29, %v911, %v911
    %v916 = vsel %vm31, %v911, %v915
    %v917 = vrot.slane %v912, 7
    %v918 = vsel %vm34, %v917, %v916
    %v919 = vsel %vm36, %v917, %v918
    %v920 = vsel %vm38, %v917, %v919
    %v921 = vsel %vm40, %v917, %v920
    %922 = vrot.lane.b32.xlu0 %v921, 48
    %v923 = vpop.permute.xlu0 %922
    %925 = vst.msk [vmem:[#allocation5 + $0xe] sm:$0x3] %vm91, %v923
    %v926 = vld [vmem:[%s749 + $0xc] sm:$0x1]
    %v927 = vld [vmem:[%s749 + $0x4c] sm:$0x1]
    %v930 = vsel %vm29, %v926, %v926
    %v931 = vsel %vm31, %v926, %v930
    %v932 = vrot.slane %v927, 7
    %v933 = vsel %vm34, %v932, %v931
    %v934 = vsel %vm36, %v932, %v933
    %v935 = vsel %vm38, %v932, %v934
    %v936 = vsel %vm40, %v932, %v935
    %937 = vrot.lane.b32.xlu0 %v936, 64
    %v938 = vpop.permute.xlu0 %937
    %940 = vst.msk [vmem:[#allocation5 + $0xe] sm:$0x3] %vm107, %v938
    %v941 = vld [vmem:[%s749 + $0xd] sm:$0x1]
    %v942 = vld [vmem:[%s749 + $0x4d] sm:$0x1]
    %v945 = vsel %vm29, %v941, %v941
    %v946 = vsel %vm31, %v941, %v945
    %v947 = vrot.slane %v942, 7
    %v948 = vsel %vm34, %v947, %v946
    %v949 = vsel %vm36, %v947, %v948
    %v950 = vsel %vm38, %v947, %v949
    %v951 = vsel %vm40, %v947, %v950
    %952 = vrot.lane.b32.xlu0 %v951, 80
    %v953 = vpop.permute.xlu0 %952
    %955 = vst.msk [vmem:[#allocation5 + $0xe] sm:$0x3] %vm123, %v953
    %v956 = vld [vmem:[%s749 + $0xe] sm:$0x1]
    %v957 = vld [vmem:[%s749 + $0x4e] sm:$0x1]
    %v960 = vsel %vm29, %v956, %v956
    %v961 = vsel %vm31, %v956, %v960
    %v962 = vrot.slane %v957, 7
    %v963 = vsel %vm34, %v962, %v961
    %v964 = vsel %vm36, %v962, %v963
    %v965 = vsel %vm38, %v962, %v964
    %v966 = vsel %vm40, %v962, %v965
    %967 = vrot.lane.b32.xlu0 %v966, 96
    %v968 = vpop.permute.xlu0 %967
    %970 = vst.msk [vmem:[#allocation5 + $0xe] sm:$0x3] %vm139, %v968
    %v971 = vld [vmem:[%s749 + $0xf] sm:$0x1]
    %v972 = vld [vmem:[%s749 + $0x4f] sm:$0x1]
    %v975 = vsel %vm29, %v971, %v971
    %v976 = vsel %vm31, %v971, %v975
    %v977 = vrot.slane %v972, 7
    %v978 = vsel %vm34, %v977, %v976
    %v979 = vsel %vm36, %v977, %v978
    %v980 = vsel %vm38, %v977, %v979
    %v981 = vsel %vm40, %v977, %v980
    %982 = vrot.lane.b32.xlu0 %v981, 112
    %v983 = vpop.permute.xlu0 %982
    %985 = vst.msk [vmem:[#allocation5 + $0xe] sm:$0x3] %vm155, %v983
    // Predicated region
    $region10: #{tpu_custom_call.1} parent=1 // pred_check
      _
    $region11: #{tpu_custom_call.1} parent=1 // pred_check_branch
      %987 = sbr.rel (0) target = $region13
    $region12: #{tpu_custom_call.1} parent=1 // pred_region
      %989 = vsyncadd [#allocation4], 0
      %s991 = sshll.u32 [#allocation5], 4
      %s992 = int_to_ptr.vmem [resolvable:$true] %s991
      %s993 = sshll.u32 %s1, 4
      %s994 = int_to_ptr.hbm [resolvable:$true] %s993
      %996 = dma.vmem_to_hbm [thread:$0]  %s992, 256, %s994, [#allocation4]
    $region13: #{tpu_custom_call.1} parent=1 // pred_fallthru
      _
    // Predicated region
    $region14: #{tpu_custom_call.1} parent=1 // pred_check
      _
    $region15: #{tpu_custom_call.1} parent=1 // pred_check_branch
      %998 = sbr.rel (0) target = $region17
    $region16: #{tpu_custom_call.1} parent=1 // pred_region
      %1000 = dma.done [#allocation4], 256
    $region17: #{tpu_custom_call.1} parent=1 // pred_fallthru
      _
    %1001 = vsyncpa [#allocation3], 1
    %1002 = vsyncpa [#allocation4], 1

</llo_original>
